<compile_context>
chip_gen: v6e
topology: v6e:2x2x1
jax: 0.10.0
libtpu: 0.0.40
codegen_flags: <defaults>
</compile_context>

<pallas_src>
import functools

import jax
import jax.numpy as jnp
import numpy as np
from jax.experimental import pallas as pl
from jax.experimental.pallas import tpu as pltpu

N_EMBD = 32
N_HEAD = 4
HEAD_SIZE = N_EMBD // N_HEAD
FEED_FORWARD = 4 * N_EMBD          # global `feed_forward` in the source module
LN_EPS = 1e-5                      # nn.LayerNorm default


def _layernorm(x, g, b):
    mu = jnp.mean(x, axis=-1, keepdims=True)
    var = jnp.mean((x - mu) ** 2, axis=-1, keepdims=True)
    return (x - mu) * jax.lax.rsqrt(var + LN_EPS) * g + b


def block_kernel(x_ref, g1_ref, b1_ref, wqkv_ref, wp_ref, bp_ref,
                 g2_ref, b2_ref, w1_ref, bf1_ref, w2_ref, bf2_ref,
                 out_ref, attn_ref, *, n_head):
    x = x_ref[0]                                  # (T, C) f32, batch dim squeezed
    T, C = x.shape
    hs = C // n_head
    scale = hs ** -0.5

    # ---- x = x + MultiHeadAttention(LayerNorm1(x)) ----
    xl = _layernorm(x, g1_ref[...], b1_ref[...])                      # (T, C)

    # Fused Q/K/V for all heads: one batched matmul against (3H, C, hs).
    xb = jnp.broadcast_to(xl, (3 * n_head, T, C))                     # (3H, T, C)
    qkv = jnp.einsum('htc,hcd->htd', xb, wqkv_ref[...],
                     preferred_element_type=jnp.float32)              # (3H, T, hs)
    q = qkv[0:n_head] * scale          # fold softmax scale into q (T*hs elems)
    k = qkv[n_head:2 * n_head]
    v = qkv[2 * n_head:3 * n_head]

    # All heads at once: (H, T, T) scores, numerically stable softmax.
    wei = jnp.einsum('htd,hsd->hts', q, k,
                     preferred_element_type=jnp.float32)
    wei = jnp.exp(wei - jnp.max(wei, axis=-1, keepdims=True))
    wei = wei * pl.reciprocal(jnp.sum(wei, axis=-1, keepdims=True), approx=True)
    attn_ref[:, 0, :, :] = wei                    # per-head attention maps

    o = jnp.einsum('hts,hsd->htd', wei, v,
                   preferred_element_type=jnp.float32)                # (H, T, hs)
    # proj(concat(heads)) == sum_h  o_h @ Wp[h*hs:(h+1)*hs, :]  -> one batched matmul
    sa = jnp.sum(jnp.einsum('htd,hdc->htc', o, wp_ref[...],
                            preferred_element_type=jnp.float32), axis=0)
    x1 = x + sa + bp_ref[...]

    # ---- x = x + FeedForward(LayerNorm2(x)) ----
    xl2 = _layernorm(x1, g2_ref[...], b2_ref[...])
    hdn = jnp.maximum(
        jnp.dot(xl2, w1_ref[...], preferred_element_type=jnp.float32)
        + bf1_ref[...], 0.0)
    ff = jnp.dot(hdn, w2_ref[...], preferred_element_type=jnp.float32) + bf2_ref[...]
    out_ref[0] = x1 + ff
    # TODO(synk): nn.Dropout is identity here (forward called with dropout=False).


def _pack_params(p):
    """Repack weights into per-head stacks (in a real model, do this once at init)."""
    wq_h = p['wq'].reshape(N_EMBD, N_HEAD, HEAD_SIZE).transpose(1, 0, 2)  # (H, C, hs)
    wk_h = p['wk'].reshape(N_EMBD, N_HEAD, HEAD_SIZE).transpose(1, 0, 2)
    wv_h = p['wv'].reshape(N_EMBD, N_HEAD, HEAD_SIZE).transpose(1, 0, 2)
    wqkv = jnp.concatenate([wq_h, wk_h, wv_h], axis=0)                    # (3H, C, hs)
    wp_h = p['wp'].reshape(N_HEAD, HEAD_SIZE, N_EMBD)                     # (H, hs, C)
    return wqkv, wp_h


def _resident_spec(a):
    # Full-array block whose index never changes -> fetched once, stays in VMEM.
    zeros = (0,) * a.ndim
    return pl.BlockSpec(a.shape, lambda b: zeros)


def block_forward(x, p):
    B, T, C = x.shape
    wqkv, wp_h = _pack_params(p)
    args = (x, p['g1'], p['b1'], wqkv, wp_h, p['bp'],
            p['g2'], p['b2'], p['w1'], p['bf1'], p['w2'], p['bf2'])

    in_specs = [pl.BlockSpec((1, T, C), lambda b: (b, 0, 0))] + \
               [_resident_spec(a) for a in args[1:]]
    out_specs = (pl.BlockSpec((1, T, C), lambda b: (b, 0, 0)),
                 pl.BlockSpec((N_HEAD, 1, T, T), lambda b: (0, b, 0, 0)))

    kernel = functools.partial(block_kernel, n_head=N_HEAD)
    return pl.pallas_call(
        kernel,
        grid=(B,),
        out_shape=(jax.ShapeDtypeStruct((B, T, C), jnp.float32),
                   jax.ShapeDtypeStruct((N_HEAD, B, T, T), jnp.float32)),
        in_specs=in_specs,
        out_specs=out_specs,
        compiler_params=pltpu.CompilerParams(
            dimension_semantics=("parallel",)),
    )(*args)


def block_reference(x, p):
    def ln(y, g, b):
        mu = jnp.mean(y, -1, keepdims=True)
        var = jnp.mean((y - mu) ** 2, -1, keepdims=True)
        return (y - mu) / jnp.sqrt(var + LN_EPS) * g + b

    B, T, C = x.shape
    hs = C // N_HEAD
    xl = ln(x, p['g1'], p['b1'])
    q, k, v = xl @ p['wq'], xl @ p['wk'], xl @ p['wv']
    outs, attns = [], []
    for h in range(N_HEAD):
        sl = slice(h * hs, (h + 1) * hs)
        wei = (q[:, :, sl] @ jnp.swapaxes(k[:, :, sl], -1, -2)) * hs ** -0.5
        wei = jax.nn.softmax(wei, -1)
        attns.append(wei)
        outs.append(wei @ v[:, :, sl])
    sa = jnp.concatenate(outs, -1) @ p['wp'] + p['bp']
    x1 = x + sa
    xl2 = ln(x1, p['g2'], p['b2'])
    ff = jnp.maximum(xl2 @ p['w1'] + p['bf1'], 0.0) @ p['w2'] + p['bf2']
    return x1 + ff, jnp.stack(attns, 0)


def init_params(key):
    ks = jax.random.split(key, 8)
    s = 0.02
    return {
        'g1': jnp.ones((1, N_EMBD), jnp.float32),
        'b1': jnp.zeros((1, N_EMBD), jnp.float32),
        'wq': s * jax.random.normal(ks[0], (N_EMBD, N_HEAD * HEAD_SIZE), jnp.float32),
        'wk': s * jax.random.normal(ks[1], (N_EMBD, N_HEAD * HEAD_SIZE), jnp.float32),
        'wv': s * jax.random.normal(ks[2], (N_EMBD, N_HEAD * HEAD_SIZE), jnp.float32),
        'wp': s * jax.random.normal(ks[3], (N_HEAD * HEAD_SIZE, N_EMBD), jnp.float32),
        'bp': s * jax.random.normal(ks[4], (1, N_EMBD), jnp.float32),
        'g2': jnp.ones((1, N_EMBD), jnp.float32),
        'b2': jnp.zeros((1, N_EMBD), jnp.float32),
        'w1': s * jax.random.normal(ks[5], (N_EMBD, FEED_FORWARD), jnp.float32),
        'bf1': s * jax.random.normal(ks[6], (1, FEED_FORWARD), jnp.float32),
        'w2': s * jax.random.normal(ks[7], (FEED_FORWARD, N_EMBD), jnp.float32),
        'bf2': jnp.zeros((1, N_EMBD), jnp.float32),
    }


if __name__ == "__main__":
    key = jax.random.PRNGKey(0)
    kx, kp = jax.random.split(key)
    B, T = 2, 8
    x = jax.random.normal(kx, (B, T, N_EMBD), jnp.float32)
    params = init_params(kp)

    out, attn = block_forward(x, params)
    out = jax.block_until_ready(out)
    attn = jax.block_until_ready(attn)

    ref_out, ref_attn = block_reference(x, params)
    # Tolerances account for pl.reciprocal(approx=True) in the softmax denominator
    # (EUP fast-reciprocal, ~1e-4 relative) plus f32 reordering of the fused matmuls.
    np.testing.assert_allclose(np.asarray(out), np.asarray(ref_out),
                               rtol=1e-2, atol=2e-3)
    np.testing.assert_allclose(np.asarray(attn), np.asarray(ref_attn),
                               rtol=1e-2, atol=2e-3)
    print("KERNEL_OK")
</pallas_src>

<mosaic_0001>
module attributes {stable_mosaic.version = 11 : i64} {
  func.func @block_kernel(%arg0: i32, %arg1: memref<1x8x32xf32, #tpu.memory_space<vmem>>, %arg2: memref<1x32xf32, #tpu.memory_space<vmem>>, %arg3: memref<1x32xf32, #tpu.memory_space<vmem>>, %arg4: memref<12x32x8xf32, #tpu.memory_space<vmem>>, %arg5: memref<4x8x32xf32, #tpu.memory_space<vmem>>, %arg6: memref<1x32xf32, #tpu.memory_space<vmem>>, %arg7: memref<1x32xf32, #tpu.memory_space<vmem>>, %arg8: memref<1x32xf32, #tpu.memory_space<vmem>>, %arg9: memref<32x128xf32, #tpu.memory_space<vmem>>, %arg10: memref<1x128xf32, #tpu.memory_space<vmem>>, %arg11: memref<128x32xf32, #tpu.memory_space<vmem>>, %arg12: memref<1x32xf32, #tpu.memory_space<vmem>>, %arg13: memref<1x8x32xf32, #tpu.memory_space<vmem>>, %arg14: memref<4x1x8x8xf32, #tpu.memory_space<vmem>>) attributes {dimension_semantics = [#tpu.dimension_semantics<parallel>], iteration_bounds = array<i64: 2>, scalar_prefetch = 0 : i64, scratch_operands = 0 : i64, tpu.core_type = #tpu.core_type<tc>, window_params = [{transform_indices = @transform_0, window_bounds = array<i64: 1, 8, 32>}, {pipeline_mode = #tpu.pipeline_mode<synchronous>, transform_indices = @transform_1, window_bounds = array<i64: 1, 32>}, {pipeline_mode = #tpu.pipeline_mode<synchronous>, transform_indices = @transform_2, window_bounds = array<i64: 1, 32>}, {pipeline_mode = #tpu.pipeline_mode<synchronous>, transform_indices = @transform_3, window_bounds = array<i64: 12, 32, 8>}, {pipeline_mode = #tpu.pipeline_mode<synchronous>, transform_indices = @transform_4, window_bounds = array<i64: 4, 8, 32>}, {pipeline_mode = #tpu.pipeline_mode<synchronous>, transform_indices = @transform_5, window_bounds = array<i64: 1, 32>}, {pipeline_mode = #tpu.pipeline_mode<synchronous>, transform_indices = @transform_6, window_bounds = array<i64: 1, 32>}, {pipeline_mode = #tpu.pipeline_mode<synchronous>, transform_indices = @transform_7, window_bounds = array<i64: 1, 32>}, {pipeline_mode = #tpu.pipeline_mode<synchronous>, transform_indices = @transform_8, window_bounds = array<i64: 32, 128>}, {pipeline_mode = #tpu.pipeline_mode<synchronous>, transform_indices = @transform_9, window_bounds = array<i64: 1, 128>}, {pipeline_mode = #tpu.pipeline_mode<synchronous>, transform_indices = @transform_10, window_bounds = array<i64: 128, 32>}, {pipeline_mode = #tpu.pipeline_mode<synchronous>, transform_indices = @transform_11, window_bounds = array<i64: 1, 32>}, {transform_indices = @transform_12, window_bounds = array<i64: 1, 8, 32>}, {transform_indices = @transform_13, window_bounds = array<i64: 4, 1, 8, 8>}]} {
    %c0 = arith.constant 0 : index
    %c0_0 = arith.constant 0 : index
    %c0_1 = arith.constant 0 : index
    %0 = vector.load %arg1[%c0, %c0_0, %c0_1] : memref<1x8x32xf32, #tpu.memory_space<vmem>>, vector<1x8x32xf32>
    %1 = vector.shape_cast %0 : vector<1x8x32xf32> to vector<8x32xf32>
    %c0_2 = arith.constant 0 : index
    %c0_3 = arith.constant 0 : index
    %2 = vector.load %arg2[%c0_2, %c0_3] : memref<1x32xf32, #tpu.memory_space<vmem>>, vector<1x32xf32>
    %c0_4 = arith.constant 0 : index
    %c0_5 = arith.constant 0 : index
    %3 = vector.load %arg3[%c0_4, %c0_5] : memref<1x32xf32, #tpu.memory_space<vmem>>, vector<1x32xf32>
    %cst = arith.constant dense<0.000000e+00> : vector<8xf32>
    %4 = vector.multi_reduction <add>, %1, %cst [1] : vector<8x32xf32> to vector<8xf32>
    %5 = vector.shape_cast %4 : vector<8xf32> to vector<8x1xf32>
    %cst_6 = arith.constant 3.200000e+01 : f32
    %6 = vector.broadcast %cst_6 : f32 to vector<8x1xf32>
    %7 = arith.divf %5, %6 : vector<8x1xf32>
    %8 = vector.broadcast %7 : vector<8x1xf32> to vector<8x32xf32>
    %9 = arith.subf %1, %8 : vector<8x32xf32>
    %10 = arith.mulf %9, %9 : vector<8x32xf32>
    %cst_7 = arith.constant dense<0.000000e+00> : vector<8xf32>
    %11 = vector.multi_reduction <add>, %10, %cst_7 [1] : vector<8x32xf32> to vector<8xf32>
    %12 = vector.shape_cast %11 : vector<8xf32> to vector<8x1xf32>
    %cst_8 = arith.constant 3.200000e+01 : f32
    %13 = vector.broadcast %cst_8 : f32 to vector<8x1xf32>
    %14 = arith.divf %12, %13 : vector<8x1xf32>
    %15 = vector.broadcast %7 : vector<8x1xf32> to vector<8x32xf32>
    %16 = arith.subf %1, %15 : vector<8x32xf32>
    %cst_9 = arith.constant 9.99999974E-6 : f32
    %17 = vector.broadcast %cst_9 : f32 to vector<8x1xf32>
    %18 = arith.addf %14, %17 : vector<8x1xf32>
    %19 = math.rsqrt %18 : vector<8x1xf32>
    %20 = vector.broadcast %19 : vector<8x1xf32> to vector<8x32xf32>
    %21 = arith.mulf %16, %20 : vector<8x32xf32>
    %22 = vector.broadcast %2 : vector<1x32xf32> to vector<8x32xf32>
    %23 = arith.mulf %21, %22 : vector<8x32xf32>
    %24 = vector.broadcast %3 : vector<1x32xf32> to vector<8x32xf32>
    %25 = arith.addf %23, %24 : vector<8x32xf32>
    %26 = vector.shape_cast %25 : vector<8x32xf32> to vector<1x8x32xf32>
    %27 = vector.broadcast %26 : vector<1x8x32xf32> to vector<12x8x32xf32>
    %c0_10 = arith.constant 0 : index
    %c0_11 = arith.constant 0 : index
    %c0_12 = arith.constant 0 : index
    %28 = vector.load %arg4[%c0_10, %c0_11, %c0_12] : memref<12x32x8xf32, #tpu.memory_space<vmem>>, vector<12x32x8xf32>
    "tpu.trace_start"() <{level = 10 : i32, message = "htc,hcd->htd"}> : () -> ()
    %cst_13 = arith.constant dense<0.000000e+00> : vector<12x8x8xf32>
    %29 = tpu.matmul %27, %28, %cst_13 {dimension_numbers = #tpu.dot_dimension_numbers<[2], [1], [1], [2], [0, 0, 0, 1, 1, 2], [0], [0]>} : vector<12x8x32xf32>, vector<12x32x8xf32>, vector<12x8x8xf32> -> vector<12x8x8xf32>
    "tpu.trace_stop"() : () -> ()
    %30 = vector.extract_strided_slice %29 {offsets = [0, 0, 0], sizes = [4, 8, 8], strides = [1, 1, 1]} : vector<12x8x8xf32> to vector<4x8x8xf32>
    %cst_14 = arith.constant 0.353553385 : f32
    %31 = vector.broadcast %cst_14 : f32 to vector<4x8x8xf32>
    %32 = arith.mulf %30, %31 : vector<4x8x8xf32>
    %33 = vector.extract_strided_slice %29 {offsets = [4, 0, 0], sizes = [4, 8, 8], strides = [1, 1, 1]} : vector<12x8x8xf32> to vector<4x8x8xf32>
    %34 = vector.extract_strided_slice %29 {offsets = [8, 0, 0], sizes = [4, 8, 8], strides = [1, 1, 1]} : vector<12x8x8xf32> to vector<4x8x8xf32>
    "tpu.trace_start"() <{level = 10 : i32, message = "htd,hsd->hts"}> : () -> ()
    %cst_15 = arith.constant dense<0.000000e+00> : vector<4x8x8xf32>
    %35 = tpu.matmul %32, %33, %cst_15 {dimension_numbers = #tpu.dot_dimension_numbers<[2], [2], [1], [1], [0, 0, 0, 1, 1, 1], [0], [0]>} : vector<4x8x8xf32>, vector<4x8x8xf32>, vector<4x8x8xf32> -> vector<4x8x8xf32>
    "tpu.trace_stop"() : () -> ()
    %cst_16 = arith.constant dense<0xFF800000> : vector<4x8xf32>
    %36 = vector.multi_reduction <maximumf>, %35, %cst_16 [2] : vector<4x8x8xf32> to vector<4x8xf32>
    %37 = vector.shape_cast %36 : vector<4x8xf32> to vector<4x8x1xf32>
    %38 = vector.broadcast %37 : vector<4x8x1xf32> to vector<4x8x8xf32>
    %39 = arith.subf %35, %38 : vector<4x8x8xf32>
    %40 = math.exp %39 : vector<4x8x8xf32>
    %cst_17 = arith.constant dense<0.000000e+00> : vector<4x8xf32>
    %41 = vector.multi_reduction <add>, %40, %cst_17 [2] : vector<4x8x8xf32> to vector<4x8xf32>
    %42 = vector.shape_cast %41 : vector<4x8xf32> to vector<4x8x1xf32>
    %43 = tpu.reciprocal %42 {approx = true} : vector<4x8x1xf32> -> vector<4x8x1xf32>
    %44 = vector.broadcast %43 : vector<4x8x1xf32> to vector<4x8x8xf32>
    %45 = arith.mulf %40, %44 : vector<4x8x8xf32>
    %c0_18 = arith.constant 0 : index
    %c0_19 = arith.constant 0 : index
    %c0_20 = arith.constant 0 : index
    %c0_21 = arith.constant 0 : index
    %46 = vector.load %arg14[%c0_18, %c0_19, %c0_20, %c0_21] : memref<4x1x8x8xf32, #tpu.memory_space<vmem>>, vector<4x1x8x8xf32>
    %47 = vector.shape_cast %46 : vector<4x1x8x8xf32> to vector<4x8x8xf32>
    %48 = vector.shape_cast %45 : vector<4x8x8xf32> to vector<4x1x8x8xf32>
    tpu.vector_store %arg14[%c0_18, %c0_19, %c0_20, %c0_21], %48 {strides = array<i32>} : memref<4x1x8x8xf32, #tpu.memory_space<vmem>>, vector<4x1x8x8xf32>,
    "tpu.trace_start"() <{level = 10 : i32, message = "hts,hsd->htd"}> : () -> ()
    %cst_22 = arith.constant dense<0.000000e+00> : vector<4x8x8xf32>
    %49 = tpu.matmul %45, %34, %cst_22 {dimension_numbers = #tpu.dot_dimension_numbers<[2], [1], [1], [2], [0, 0, 0, 1, 1, 2], [0], [0]>} : vector<4x8x8xf32>, vector<4x8x8xf32>, vector<4x8x8xf32> -> vector<4x8x8xf32>
    "tpu.trace_stop"() : () -> ()
    %c0_23 = arith.constant 0 : index
    %c0_24 = arith.constant 0 : index
    %c0_25 = arith.constant 0 : index
    %50 = vector.load %arg5[%c0_23, %c0_24, %c0_25] : memref<4x8x32xf32, #tpu.memory_space<vmem>>, vector<4x8x32xf32>
    "tpu.trace_start"() <{level = 10 : i32, message = "htd,hdc->htc"}> : () -> ()
    %cst_26 = arith.constant dense<0.000000e+00> : vector<4x8x32xf32>
    %51 = tpu.matmul %49, %50, %cst_26 {dimension_numbers = #tpu.dot_dimension_numbers<[2], [1], [1], [2], [0, 0, 0, 1, 1, 2], [0], [0]>} : vector<4x8x8xf32>, vector<4x8x32xf32>, vector<4x8x32xf32> -> vector<4x8x32xf32>
    "tpu.trace_stop"() : () -> ()
    %cst_27 = arith.constant dense<0.000000e+00> : vector<8x32xf32>
    %52 = vector.multi_reduction <add>, %51, %cst_27 [0] : vector<4x8x32xf32> to vector<8x32xf32>
    %53 = arith.addf %1, %52 : vector<8x32xf32>
    %c0_28 = arith.constant 0 : index
    %c0_29 = arith.constant 0 : index
    %54 = vector.load %arg6[%c0_28, %c0_29] : memref<1x32xf32, #tpu.memory_space<vmem>>, vector<1x32xf32>
    %55 = vector.broadcast %54 : vector<1x32xf32> to vector<8x32xf32>
    %56 = arith.addf %53, %55 : vector<8x32xf32>
    %c0_30 = arith.constant 0 : index
    %c0_31 = arith.constant 0 : index
    %57 = vector.load %arg7[%c0_30, %c0_31] : memref<1x32xf32, #tpu.memory_space<vmem>>, vector<1x32xf32>
    %c0_32 = arith.constant 0 : index
    %c0_33 = arith.constant 0 : index
    %58 = vector.load %arg8[%c0_32, %c0_33] : memref<1x32xf32, #tpu.memory_space<vmem>>, vector<1x32xf32>
    %cst_34 = arith.constant dense<0.000000e+00> : vector<8xf32>
    %59 = vector.multi_reduction <add>, %56, %cst_34 [1] : vector<8x32xf32> to vector<8xf32>
    %60 = vector.shape_cast %59 : vector<8xf32> to vector<8x1xf32>
    %cst_35 = arith.constant 3.200000e+01 : f32
    %61 = vector.broadcast %cst_35 : f32 to vector<8x1xf32>
    %62 = arith.divf %60, %61 : vector<8x1xf32>
    %63 = vector.broadcast %62 : vector<8x1xf32> to vector<8x32xf32>
    %64 = arith.subf %56, %63 : vector<8x32xf32>
    %65 = arith.mulf %64, %64 : vector<8x32xf32>
    %cst_36 = arith.constant dense<0.000000e+00> : vector<8xf32>
    %66 = vector.multi_reduction <add>, %65, %cst_36 [1] : vector<8x32xf32> to vector<8xf32>
    %67 = vector.shape_cast %66 : vector<8xf32> to vector<8x1xf32>
    %cst_37 = arith.constant 3.200000e+01 : f32
    %68 = vector.broadcast %cst_37 : f32 to vector<8x1xf32>
    %69 = arith.divf %67, %68 : vector<8x1xf32>
    %70 = vector.broadcast %62 : vector<8x1xf32> to vector<8x32xf32>
    %71 = arith.subf %56, %70 : vector<8x32xf32>
    %cst_38 = arith.constant 9.99999974E-6 : f32
    %72 = vector.broadcast %cst_38 : f32 to vector<8x1xf32>
    %73 = arith.addf %69, %72 : vector<8x1xf32>
    %74 = math.rsqrt %73 : vector<8x1xf32>
    %75 = vector.broadcast %74 : vector<8x1xf32> to vector<8x32xf32>
    %76 = arith.mulf %71, %75 : vector<8x32xf32>
    %77 = vector.broadcast %57 : vector<1x32xf32> to vector<8x32xf32>
    %78 = arith.mulf %76, %77 : vector<8x32xf32>
    %79 = vector.broadcast %58 : vector<1x32xf32> to vector<8x32xf32>
    %80 = arith.addf %78, %79 : vector<8x32xf32>
    %c0_39 = arith.constant 0 : index
    %c0_40 = arith.constant 0 : index
    %81 = vector.load %arg9[%c0_39, %c0_40] : memref<32x128xf32, #tpu.memory_space<vmem>>, vector<32x128xf32>
    %cst_41 = arith.constant dense<0.000000e+00> : vector<8x128xf32>
    %82 = tpu.matmul %80, %81, %cst_41 {dimension_numbers = #tpu.dot_dimension_numbers<[1], [0], [0], [1], [0, 0, 1, 1], [], []>} : vector<8x32xf32>, vector<32x128xf32>, vector<8x128xf32> -> vector<8x128xf32>
    %c0_42 = arith.constant 0 : index
    %c0_43 = arith.constant 0 : index
    %83 = vector.load %arg10[%c0_42, %c0_43] : memref<1x128xf32, #tpu.memory_space<vmem>>, vector<1x128xf32>
    %84 = vector.broadcast %83 : vector<1x128xf32> to vector<8x128xf32>
    %85 = arith.addf %82, %84 : vector<8x128xf32>
    %cst_44 = arith.constant 0.000000e+00 : f32
    %86 = vector.broadcast %cst_44 : f32 to vector<8x128xf32>
    %87 = arith.maximumf %85, %86 : vector<8x128xf32>
    %c0_45 = arith.constant 0 : index
    %c0_46 = arith.constant 0 : index
    %88 = vector.load %arg11[%c0_45, %c0_46] : memref<128x32xf32, #tpu.memory_space<vmem>>, vector<128x32xf32>
    %cst_47 = arith.constant dense<0.000000e+00> : vector<8x32xf32>
    %89 = tpu.matmul %87, %88, %cst_47 {dimension_numbers = #tpu.dot_dimension_numbers<[1], [0], [0], [1], [0, 0, 1, 1], [], []>} : vector<8x128xf32>, vector<128x32xf32>, vector<8x32xf32> -> vector<8x32xf32>
    %c0_48 = arith.constant 0 : index
    %c0_49 = arith.constant 0 : index
    %90 = vector.load %arg12[%c0_48, %c0_49] : memref<1x32xf32, #tpu.memory_space<vmem>>, vector<1x32xf32>
    %91 = vector.broadcast %90 : vector<1x32xf32> to vector<8x32xf32>
    %92 = arith.addf %89, %91 : vector<8x32xf32>
    %93 = arith.addf %56, %92 : vector<8x32xf32>
    %c0_50 = arith.constant 0 : index
    %c0_51 = arith.constant 0 : index
    %c0_52 = arith.constant 0 : index
    %94 = vector.load %arg13[%c0_50, %c0_51, %c0_52] : memref<1x8x32xf32, #tpu.memory_space<vmem>>, vector<1x8x32xf32>
    %95 = vector.shape_cast %94 : vector<1x8x32xf32> to vector<8x32xf32>
    %96 = vector.shape_cast %93 : vector<8x32xf32> to vector<1x8x32xf32>
    tpu.vector_store %arg13[%c0_50, %c0_51, %c0_52], %96 {strides = array<i32>} : memref<1x8x32xf32, #tpu.memory_space<vmem>>, vector<1x8x32xf32>,
    return
  }
  func.func @transform_0(%arg0: i32) -> (i32, i32, i32) {
    %c0_i32 = arith.constant 0 : i32
    %c0_i32_0 = arith.constant 0 : i32
    %c0_i32_1 = arith.constant 0 : i32
    return %arg0, %c0_i32, %c0_i32_0 : i32, i32, i32
  }
  func.func @transform_1(%arg0: i32) -> (i32, i32) {
    %c0_i32 = arith.constant 0 : i32
    %c0_i32_0 = arith.constant 0 : i32
    %c0_i32_1 = arith.constant 0 : i32
    return %c0_i32, %c0_i32_0 : i32, i32
  }
  func.func @transform_2(%arg0: i32) -> (i32, i32) {
    %c0_i32 = arith.constant 0 : i32
    %c0_i32_0 = arith.constant 0 : i32
    %c0_i32_1 = arith.constant 0 : i32
    return %c0_i32, %c0_i32_0 : i32, i32
  }
  func.func @transform_3(%arg0: i32) -> (i32, i32, i32) {
    %c0_i32 = arith.constant 0 : i32
    %c0_i32_0 = arith.constant 0 : i32
    %c0_i32_1 = arith.constant 0 : i32
    %c0_i32_2 = arith.constant 0 : i32
    return %c0_i32, %c0_i32_0, %c0_i32_1 : i32, i32, i32
  }
  func.func @transform_4(%arg0: i32) -> (i32, i32, i32) {
    %c0_i32 = arith.constant 0 : i32
    %c0_i32_0 = arith.constant 0 : i32
    %c0_i32_1 = arith.constant 0 : i32
    %c0_i32_2 = arith.constant 0 : i32
    return %c0_i32, %c0_i32_0, %c0_i32_1 : i32, i32, i32
  }
  func.func @transform_5(%arg0: i32) -> (i32, i32) {
    %c0_i32 = arith.constant 0 : i32
    %c0_i32_0 = arith.constant 0 : i32
    %c0_i32_1 = arith.constant 0 : i32
    return %c0_i32, %c0_i32_0 : i32, i32
  }
  func.func @transform_6(%arg0: i32) -> (i32, i32) {
    %c0_i32 = arith.constant 0 : i32
    %c0_i32_0 = arith.constant 0 : i32
    %c0_i32_1 = arith.constant 0 : i32
    return %c0_i32, %c0_i32_0 : i32, i32
  }
  func.func @transform_7(%arg0: i32) -> (i32, i32) {
    %c0_i32 = arith.constant 0 : i32
    %c0_i32_0 = arith.constant 0 : i32
    %c0_i32_1 = arith.constant 0 : i32
    return %c0_i32, %c0_i32_0 : i32, i32
  }
  func.func @transform_8(%arg0: i32) -> (i32, i32) {
    %c0_i32 = arith.constant 0 : i32
    %c0_i32_0 = arith.constant 0 : i32
    %c0_i32_1 = arith.constant 0 : i32
    return %c0_i32, %c0_i32_0 : i32, i32
  }
  func.func @transform_9(%arg0: i32) -> (i32, i32) {
    %c0_i32 = arith.constant 0 : i32
    %c0_i32_0 = arith.constant 0 : i32
    %c0_i32_1 = arith.constant 0 : i32
    return %c0_i32, %c0_i32_0 : i32, i32
  }
  func.func @transform_10(%arg0: i32) -> (i32, i32) {
    %c0_i32 = arith.constant 0 : i32
    %c0_i32_0 = arith.constant 0 : i32
    %c0_i32_1 = arith.constant 0 : i32
    return %c0_i32, %c0_i32_0 : i32, i32
  }
  func.func @transform_11(%arg0: i32) -> (i32, i32) {
    %c0_i32 = arith.constant 0 : i32
    %c0_i32_0 = arith.constant 0 : i32
    %c0_i32_1 = arith.constant 0 : i32
    return %c0_i32, %c0_i32_0 : i32, i32
  }
  func.func @transform_12(%arg0: i32) -> (i32, i32, i32) {
    %c0_i32 = arith.constant 0 : i32
    %c0_i32_0 = arith.constant 0 : i32
    %c0_i32_1 = arith.constant 0 : i32
    return %arg0, %c0_i32, %c0_i32_0 : i32, i32, i32
  }
  func.func @transform_13(%arg0: i32) -> (i32, i32, i32, i32) {
    %c0_i32 = arith.constant 0 : i32
    %c0_i32_0 = arith.constant 0 : i32
    %c0_i32_1 = arith.constant 0 : i32
    %c0_i32_2 = arith.constant 0 : i32
    return %c0_i32, %arg0, %c0_i32_0, %c0_i32_1 : i32, i32, i32, i32
  }
}

</mosaic_0001>

<llo_original>
// kernel: tpu_custom_call.1
$region0: #{tpu_custom_call.1}
  #allocation0 [shape = 'u32[]', space=smem, size = 0x4, offset = 0x4, fixed_abs, tag = 'smem constant byte address 0x4 - core index']
  #allocation1 [shape = 'u32[144,128]{1,0:T(1,128)}', space=vmem, size = 0x12000, scoped, tag = 'internal scratch']
  %s0 = inlined_call_operand.vmem [shape: f32[2,8,32], index: 0, kind: input, shape index: {}]
  %s1 = inlined_call_operand.vmem [shape: f32[1,32], index: 1, kind: input, shape index: {}]
  %s2 = inlined_call_operand.vmem [shape: f32[1,32], index: 2, kind: input, shape index: {}]
  %s3 = inlined_call_operand.vmem [shape: f32[12,32,8], index: 3, kind: input, shape index: {}]
  %s4 = inlined_call_operand.vmem [shape: f32[4,8,32], index: 4, kind: input, shape index: {}]
  %s5 = inlined_call_operand.vmem [shape: f32[1,32], index: 5, kind: input, shape index: {}]
  %s6 = inlined_call_operand.vmem [shape: f32[1,32], index: 6, kind: input, shape index: {}]
  %s7 = inlined_call_operand.vmem [shape: f32[1,32], index: 7, kind: input, shape index: {}]
  %s8 = inlined_call_operand.vmem [shape: f32[32,128], index: 8, kind: input, shape index: {}]
  %s9 = inlined_call_operand.vmem [shape: f32[1,128], index: 9, kind: input, shape index: {}]
  %s10 = inlined_call_operand.vmem [shape: f32[128,32], index: 10, kind: input, shape index: {}]
  %s11 = inlined_call_operand.vmem [shape: f32[1,32], index: 11, kind: input, shape index: {}]
  %s12 = inlined_call_operand.hbm [shape: f32[2,8,32], index: 12, kind: output, shape index: {0}]
  %s13 = inlined_call_operand.hbm [shape: f32[4,2,8,8], index: 13, kind: output, shape index: {1}]
  %14 = xla_tuple %s12, %s13
  %s15 = sld [smem:[#allocation0]]
  $region89: #{tpu_custom_call.1} parent=0
    _
  %s17 = ssub.s32 1, %s15
  %s18 = scalar_select 0, %s17, %s15
  $region1: #{tpu_custom_call.1} parent=0
    #allocation2 [shape = 'u8[8192]{0}', space=vmem, size = 0x2000, scoped, tag = 'output window, operand 0']
    #allocation3 [shape = 's32[2]{0}', space=sflag, size = 0x8, scoped, tag = 'scoped memory for tpu_custom_call.1']
    #allocation4 [shape = 'u8[32768]{0}', space=vmem, size = 0x8000, scoped, tag = 'output window, operand 1']
    #allocation5 [shape = 's32[2]{0}', space=sflag, size = 0x8, scoped, tag = 'scoped memory for tpu_custom_call.1']
    %19 = vsyncpa [#allocation3], 0
    %s20 = scalar_lea.sflag [#allocation3], 1
    %21 = vsyncpa %s20, 0
    %22 = vsyncpa [#allocation5], 0
    %s23 = scalar_lea.sflag [#allocation5], 1
    %24 = vsyncpa %s23, 0
    loop: start=0, step=1, limit=4
    $region2: #{tpu_custom_call.1} parent=1 // loop_pre_header
      _
    $region3: #{tpu_custom_call.1} parent=1 // loop_header
      %s26 = sphi 0, %s30
      %p27 = scmp.ge.s32.totalorder %s26, 4
      %s36 = sphi 0, %s38
      %s39 = sphi 0, %s36
      %s40 = sphi 0, %s39
      %s56 = sphi 0, %s40
      %s60 = sphi 0, %s60
      %s62 = sphi 0, %s60
      %s63 = sphi 0, %s62
      %s77 = sphi 0, %s63
      %s81 = sphi 0, %s81
      %s83 = sphi 0, %s81
      %s84 = sphi 0, %s83
      %s98 = sphi 0, %s84
      %s102 = sphi 0, %s102
      %s104 = sphi 0, %s102
      %s105 = sphi 0, %s104
      %s119 = sphi 0, %s105
      %s123 = sphi 0, %s123
      %s125 = sphi 0, %s123
      %s126 = sphi 0, %s125
      %s140 = sphi 0, %s126
      %s144 = sphi 0, %s144
      %s146 = sphi 0, %s144
      %s147 = sphi 0, %s146
      %s161 = sphi 0, %s147
      %s165 = sphi 0, %s165
      %s167 = sphi 0, %s165
      %s168 = sphi 0, %s167
      %s182 = sphi 0, %s168
      %s186 = sphi 0, %s186
      %s188 = sphi 0, %s186
      %s189 = sphi 0, %s188
      %s203 = sphi 0, %s189
      %s207 = sphi 0, %s207
      %s209 = sphi 0, %s207
      %s210 = sphi 0, %s209
      %s224 = sphi 0, %s210
      %s228 = sphi 0, %s228
      %s230 = sphi 0, %s228
      %s231 = sphi 0, %s230
      %s245 = sphi 0, %s231
      %s249 = sphi 0, %s249
      %s251 = sphi 0, %s249
      %s252 = sphi 0, %s251
      %s266 = sphi 0, %s252
      %s270 = sphi 0, %s270
      %s272 = sphi 0, %s270
      %s273 = sphi 0, %s272
      %s287 = sphi 0, %s273
      %s293 = sphi 0, %s295
      %s296 = sphi 0, %s293
      %s297 = sphi 0, %s296
      %s313 = sphi 0, %s297
      %s319 = sphi 0, %s321
      %s322 = sphi 0, %s319
      %s323 = sphi 0, %s322
      %s339 = sphi 0, %s323
    $region4: #{tpu_custom_call.1} parent=1 // loop_header_branch
      %29 = sbr.rel (%p27) target = $region8
    $region5: #{tpu_custom_call.1} parent=1 // loop_body
      %s31 = ssub.s32 %s26, 1
      %s32 = ssub.s32 %s26, 2
      %s33 = sadd.s32 %s26, 1
      %s34 = ssub.s32 %s26, %s33
      %p35 = scmp.eq.s32.totalorder %s34, 0
      %s37 = sadd.s32 %s36, 1
      %s38 = scalar_select %p35, %s36, %s37
      %p41 = pneg %p35
      %p42 = scmp.eq.s32.totalorder %s26, 1
      %p43 = por %p41, %p42
      %p44 = scmp.ne.s32.totalorder %s36, %s39
      %p45 = scmp.eq.s32.totalorder %s26, 0
      %p46 = por %p44, %p45
      %p47 = scmp.ne.s32.totalorder %s36, %s39
      %p48 = scmp.eq.s32.totalorder %s31, 1
      %p49 = por %p47, %p48
      %p50 = scmp.ne.s32.totalorder %s39, %s40
      %p51 = scmp.eq.s32.totalorder %s31, 0
      %p52 = por %p50, %p51
      %p53 = scmp.ne.s32.totalorder %s39, %s40
      %p54 = scmp.eq.s32.totalorder %s32, 1
      %p55 = por %p53, %p54
      %p57 = scmp.ne.s32.totalorder %s40, %s56
      %p58 = scmp.eq.s32.totalorder %s32, 0
      %p59 = por %p57, %p58
      %s61 = sadd.s32 %s60, 1
      %p64 = scmp.eq.s32.totalorder %s26, 1
      %p65 = scmp.ne.s32.totalorder %s60, %s62
      %p66 = scmp.eq.s32.totalorder %s26, 0
      %p67 = por %p65, %p66
      %p68 = scmp.ne.s32.totalorder %s60, %s62
      %p69 = scmp.eq.s32.totalorder %s31, 1
      %p70 = por %p68, %p69
      %p71 = scmp.ne.s32.totalorder %s62, %s63
      %p72 = scmp.eq.s32.totalorder %s31, 0
      %p73 = por %p71, %p72
      %p74 = scmp.ne.s32.totalorder %s62, %s63
      %p75 = scmp.eq.s32.totalorder %s32, 1
      %p76 = por %p74, %p75
      %p78 = scmp.ne.s32.totalorder %s63, %s77
      %p79 = scmp.eq.s32.totalorder %s32, 0
      %p80 = por %p78, %p79
      %s82 = sadd.s32 %s81, 1
      %p85 = scmp.eq.s32.totalorder %s26, 1
      %p86 = scmp.ne.s32.totalorder %s81, %s83
      %p87 = scmp.eq.s32.totalorder %s26, 0
      %p88 = por %p86, %p87
      %p89 = scmp.ne.s32.totalorder %s81, %s83
      %p90 = scmp.eq.s32.totalorder %s31, 1
      %p91 = por %p89, %p90
      %p92 = scmp.ne.s32.totalorder %s83, %s84
      %p93 = scmp.eq.s32.totalorder %s31, 0
      %p94 = por %p92, %p93
      %p95 = scmp.ne.s32.totalorder %s83, %s84
      %p96 = scmp.eq.s32.totalorder %s32, 1
      %p97 = por %p95, %p96
      %p99 = scmp.ne.s32.totalorder %s84, %s98
      %p100 = scmp.eq.s32.totalorder %s32, 0
      %p101 = por %p99, %p100
      %s103 = sadd.s32 %s102, 1
      %p106 = scmp.eq.s32.totalorder %s26, 1
      %p107 = scmp.ne.s32.totalorder %s102, %s104
      %p108 = scmp.eq.s32.totalorder %s26, 0
      %p109 = por %p107, %p108
      %p110 = scmp.ne.s32.totalorder %s102, %s104
      %p111 = scmp.eq.s32.totalorder %s31, 1
      %p112 = por %p110, %p111
      %p113 = scmp.ne.s32.totalorder %s104, %s105
      %p114 = scmp.eq.s32.totalorder %s31, 0
      %p115 = por %p113, %p114
      %p116 = scmp.ne.s32.totalorder %s104, %s105
      %p117 = scmp.eq.s32.totalorder %s32, 1
      %p118 = por %p116, %p117
      %p120 = scmp.ne.s32.totalorder %s105, %s119
      %p121 = scmp.eq.s32.totalorder %s32, 0
      %p122 = por %p120, %p121
      %s124 = sadd.s32 %s123, 1
      %p127 = scmp.eq.s32.totalorder %s26, 1
      %p128 = scmp.ne.s32.totalorder %s123, %s125
      %p129 = scmp.eq.s32.totalorder %s26, 0
      %p130 = por %p128, %p129
      %p131 = scmp.ne.s32.totalorder %s123, %s125
      %p132 = scmp.eq.s32.totalorder %s31, 1
      %p133 = por %p131, %p132
      %p134 = scmp.ne.s32.totalorder %s125, %s126
      %p135 = scmp.eq.s32.totalorder %s31, 0
      %p136 = por %p134, %p135
      %p137 = scmp.ne.s32.totalorder %s125, %s126
      %p138 = scmp.eq.s32.totalorder %s32, 1
      %p139 = por %p137, %p138
      %p141 = scmp.ne.s32.totalorder %s126, %s140
      %p142 = scmp.eq.s32.totalorder %s32, 0
      %p143 = por %p141, %p142
      %s145 = sadd.s32 %s144, 1
      %p148 = scmp.eq.s32.totalorder %s26, 1
      %p149 = scmp.ne.s32.totalorder %s144, %s146
      %p150 = scmp.eq.s32.totalorder %s26, 0
      %p151 = por %p149, %p150
      %p152 = scmp.ne.s32.totalorder %s144, %s146
      %p153 = scmp.eq.s32.totalorder %s31, 1
      %p154 = por %p152, %p153
      %p155 = scmp.ne.s32.totalorder %s146, %s147
      %p156 = scmp.eq.s32.totalorder %s31, 0
      %p157 = por %p155, %p156
      %p158 = scmp.ne.s32.totalorder %s146, %s147
      %p159 = scmp.eq.s32.totalorder %s32, 1
      %p160 = por %p158, %p159
      %p162 = scmp.ne.s32.totalorder %s147, %s161
      %p163 = scmp.eq.s32.totalorder %s32, 0
      %p164 = por %p162, %p163
      %s166 = sadd.s32 %s165, 1
      %p169 = scmp.eq.s32.totalorder %s26, 1
      %p170 = scmp.ne.s32.totalorder %s165, %s167
      %p171 = scmp.eq.s32.totalorder %s26, 0
      %p172 = por %p170, %p171
      %p173 = scmp.ne.s32.totalorder %s165, %s167
      %p174 = scmp.eq.s32.totalorder %s31, 1
      %p175 = por %p173, %p174
      %p176 = scmp.ne.s32.totalorder %s167, %s168
      %p177 = scmp.eq.s32.totalorder %s31, 0
      %p178 = por %p176, %p177
      %p179 = scmp.ne.s32.totalorder %s167, %s168
      %p180 = scmp.eq.s32.totalorder %s32, 1
      %p181 = por %p179, %p180
      %p183 = scmp.ne.s32.totalorder %s168, %s182
      %p184 = scmp.eq.s32.totalorder %s32, 0
      %p185 = por %p183, %p184
      %s187 = sadd.s32 %s186, 1
      %p190 = scmp.eq.s32.totalorder %s26, 1
      %p191 = scmp.ne.s32.totalorder %s186, %s188
      %p192 = scmp.eq.s32.totalorder %s26, 0
      %p193 = por %p191, %p192
      %p194 = scmp.ne.s32.totalorder %s186, %s188
      %p195 = scmp.eq.s32.totalorder %s31, 1
      %p196 = por %p194, %p195
      %p197 = scmp.ne.s32.totalorder %s188, %s189
      %p198 = scmp.eq.s32.totalorder %s31, 0
      %p199 = por %p197, %p198
      %p200 = scmp.ne.s32.totalorder %s188, %s189
      %p201 = scmp.eq.s32.totalorder %s32, 1
      %p202 = por %p200, %p201
      %p204 = scmp.ne.s32.totalorder %s189, %s203
      %p205 = scmp.eq.s32.totalorder %s32, 0
      %p206 = por %p204, %p205
      %s208 = sadd.s32 %s207, 1
      %p211 = scmp.eq.s32.totalorder %s26, 1
      %p212 = scmp.ne.s32.totalorder %s207, %s209
      %p213 = scmp.eq.s32.totalorder %s26, 0
      %p214 = por %p212, %p213
      %p215 = scmp.ne.s32.totalorder %s207, %s209
      %p216 = scmp.eq.s32.totalorder %s31, 1
      %p217 = por %p215, %p216
      %p218 = scmp.ne.s32.totalorder %s209, %s210
      %p219 = scmp.eq.s32.totalorder %s31, 0
      %p220 = por %p218, %p219
      %p221 = scmp.ne.s32.totalorder %s209, %s210
      %p222 = scmp.eq.s32.totalorder %s32, 1
      %p223 = por %p221, %p222
      %p225 = scmp.ne.s32.totalorder %s210, %s224
      %p226 = scmp.eq.s32.totalorder %s32, 0
      %p227 = por %p225, %p226
      %s229 = sadd.s32 %s228, 1
      %p232 = scmp.eq.s32.totalorder %s26, 1
      %p233 = scmp.ne.s32.totalorder %s228, %s230
      %p234 = scmp.eq.s32.totalorder %s26, 0
      %p235 = por %p233, %p234
      %p236 = scmp.ne.s32.totalorder %s228, %s230
      %p237 = scmp.eq.s32.totalorder %s31, 1
      %p238 = por %p236, %p237
      %p239 = scmp.ne.s32.totalorder %s230, %s231
      %p240 = scmp.eq.s32.totalorder %s31, 0
      %p241 = por %p239, %p240
      %p242 = scmp.ne.s32.totalorder %s230, %s231
      %p243 = scmp.eq.s32.totalorder %s32, 1
      %p244 = por %p242, %p243
      %p246 = scmp.ne.s32.totalorder %s231, %s245
      %p247 = scmp.eq.s32.totalorder %s32, 0
      %p248 = por %p246, %p247
      %s250 = sadd.s32 %s249, 1
      %p253 = scmp.eq.s32.totalorder %s26, 1
      %p254 = scmp.ne.s32.totalorder %s249, %s251
      %p255 = scmp.eq.s32.totalorder %s26, 0
      %p256 = por %p254, %p255
      %p257 = scmp.ne.s32.totalorder %s249, %s251
      %p258 = scmp.eq.s32.totalorder %s31, 1
      %p259 = por %p257, %p258
      %p260 = scmp.ne.s32.totalorder %s251, %s252
      %p261 = scmp.eq.s32.totalorder %s31, 0
      %p262 = por %p260, %p261
      %p263 = scmp.ne.s32.totalorder %s251, %s252
      %p264 = scmp.eq.s32.totalorder %s32, 1
      %p265 = por %p263, %p264
      %p267 = scmp.ne.s32.totalorder %s252, %s266
      %p268 = scmp.eq.s32.totalorder %s32, 0
      %p269 = por %p267, %p268
      %s271 = sadd.s32 %s270, 1
      %p274 = scmp.eq.s32.totalorder %s26, 1
      %p275 = scmp.ne.s32.totalorder %s270, %s272
      %p276 = scmp.eq.s32.totalorder %s26, 0
      %p277 = por %p275, %p276
      %p278 = scmp.ne.s32.totalorder %s270, %s272
      %p279 = scmp.eq.s32.totalorder %s31, 1
      %p280 = por %p278, %p279
      %p281 = scmp.ne.s32.totalorder %s272, %s273
      %p282 = scmp.eq.s32.totalorder %s31, 0
      %p283 = por %p281, %p282
      %p284 = scmp.ne.s32.totalorder %s272, %s273
      %p285 = scmp.eq.s32.totalorder %s32, 1
      %p286 = por %p284, %p285
      %p288 = scmp.ne.s32.totalorder %s273, %s287
      %p289 = scmp.eq.s32.totalorder %s32, 0
      %p290 = por %p288, %p289
      %s291 = ssub.s32 %s26, %s33
      %p292 = scmp.eq.s32.totalorder %s291, 0
      %s294 = sadd.s32 %s293, 1
      %s295 = scalar_select %p292, %s293, %s294
      %p298 = pneg %p292
      %p299 = scmp.eq.s32.totalorder %s26, 1
      %p300 = por %p298, %p299
      %p301 = scmp.ne.s32.totalorder %s293, %s296
      %p302 = scmp.eq.s32.totalorder %s26, 0
      %p303 = por %p301, %p302
      %p304 = scmp.ne.s32.totalorder %s293, %s296
      %p305 = scmp.eq.s32.totalorder %s31, 1
      %p306 = por %p304, %p305
      %p307 = scmp.ne.s32.totalorder %s296, %s297
      %p308 = scmp.eq.s32.totalorder %s31, 0
      %p309 = por %p307, %p308
      %p310 = scmp.ne.s32.totalorder %s296, %s297
      %p311 = scmp.eq.s32.totalorder %s32, 1
      %p312 = por %p310, %p311
      %p314 = scmp.ne.s32.totalorder %s297, %s313
      %p315 = scmp.eq.s32.totalorder %s32, 0
      %p316 = por %p314, %p315
      %s317 = ssub.s32 %s26, %s33
      %p318 = scmp.eq.s32.totalorder %s317, 0
      %s320 = sadd.s32 %s319, 1
      %s321 = scalar_select %p318, %s319, %s320
      %p324 = pneg %p318
      %p325 = scmp.eq.s32.totalorder %s26, 1
      %p326 = por %p324, %p325
      %p327 = scmp.ne.s32.totalorder %s319, %s322
      %p328 = scmp.eq.s32.totalorder %s26, 0
      %p329 = por %p327, %p328
      %p330 = scmp.ne.s32.totalorder %s319, %s322
      %p331 = scmp.eq.s32.totalorder %s31, 1
      %p332 = por %p330, %p331
      %p333 = scmp.ne.s32.totalorder %s322, %s323
      %p334 = scmp.eq.s32.totalorder %s31, 0
      %p335 = por %p333, %p334
      %p336 = scmp.ne.s32.totalorder %s322, %s323
      %p337 = scmp.eq.s32.totalorder %s32, 1
      %p338 = por %p336, %p337
      %p340 = scmp.ne.s32.totalorder %s323, %s339
      %p341 = scmp.eq.s32.totalorder %s32, 0
      %p342 = por %p340, %p341
      %p343 = scmp.le.s32.totalorder 1, %s26
      %p344 = scmp.lt.s32.totalorder %s26, 3
      %p345 = pnand %p343, %p344
      %p346 = pneg %p345
      // Predicated region
      $region9: #{tpu_custom_call.1} parent=5 // pred_check
        _
      $region10: #{tpu_custom_call.1} parent=5 // pred_check_branch
        %348 = sbr.rel (%p345) target = $region12
      $region11: #{tpu_custom_call.1} parent=5 // pred_region
        %s349 = ssub.s32 %s26, 1
        // Predicated region
        $region13: #{tpu_custom_call.1} parent=11 // pred_check
          %p350 = pneg %p73
        $region14: #{tpu_custom_call.1} parent=11 // pred_check_branch
          %352 = sbr.rel (%p350) target = $region16
        $region15: #{tpu_custom_call.1} parent=11 // pred_region
          _
        $region16: #{tpu_custom_call.1} parent=11 // pred_fallthru
          _
        // Predicated region
        $region17: #{tpu_custom_call.1} parent=11 // pred_check
          %p353 = pneg %p94
        $region18: #{tpu_custom_call.1} parent=11 // pred_check_branch
          %355 = sbr.rel (%p353) target = $region20
        $region19: #{tpu_custom_call.1} parent=11 // pred_region
          _
        $region20: #{tpu_custom_call.1} parent=11 // pred_fallthru
          _
        // Predicated region
        $region21: #{tpu_custom_call.1} parent=11 // pred_check
          %p356 = pneg %p115
        $region22: #{tpu_custom_call.1} parent=11 // pred_check_branch
          %358 = sbr.rel (%p356) target = $region24
        $region23: #{tpu_custom_call.1} parent=11 // pred_region
          _
        $region24: #{tpu_custom_call.1} parent=11 // pred_fallthru
          _
        // Predicated region
        $region25: #{tpu_custom_call.1} parent=11 // pred_check
          %p359 = pneg %p136
        $region26: #{tpu_custom_call.1} parent=11 // pred_check_branch
          %361 = sbr.rel (%p359) target = $region28
        $region27: #{tpu_custom_call.1} parent=11 // pred_region
          _
        $region28: #{tpu_custom_call.1} parent=11 // pred_fallthru
          _
        // Predicated region
        $region29: #{tpu_custom_call.1} parent=11 // pred_check
          %p362 = pneg %p157
        $region30: #{tpu_custom_call.1} parent=11 // pred_check_branch
          %364 = sbr.rel (%p362) target = $region32
        $region31: #{tpu_custom_call.1} parent=11 // pred_region
          _
        $region32: #{tpu_custom_call.1} parent=11 // pred_fallthru
          _
        // Predicated region
        $region33: #{tpu_custom_call.1} parent=11 // pred_check
          %p365 = pneg %p178
        $region34: #{tpu_custom_call.1} parent=11 // pred_check_branch
          %367 = sbr.rel (%p365) target = $region36
        $region35: #{tpu_custom_call.1} parent=11 // pred_region
          _
        $region36: #{tpu_custom_call.1} parent=11 // pred_fallthru
          _
        // Predicated region
        $region37: #{tpu_custom_call.1} parent=11 // pred_check
          %p368 = pneg %p199
        $region38: #{tpu_custom_call.1} parent=11 // pred_check_branch
          %370 = sbr.rel (%p368) target = $region40
        $region39: #{tpu_custom_call.1} parent=11 // pred_region
          _
        $region40: #{tpu_custom_call.1} parent=11 // pred_fallthru
          _
        // Predicated region
        $region41: #{tpu_custom_call.1} parent=11 // pred_check
          %p371 = pneg %p220
        $region42: #{tpu_custom_call.1} parent=11 // pred_check_branch
          %373 = sbr.rel (%p371) target = $region44
        $region43: #{tpu_custom_call.1} parent=11 // pred_region
          _
        $region44: #{tpu_custom_call.1} parent=11 // pred_fallthru
          _
        // Predicated region
        $region45: #{tpu_custom_call.1} parent=11 // pred_check
          %p374 = pneg %p241
        $region46: #{tpu_custom_call.1} parent=11 // pred_check_branch
          %376 = sbr.rel (%p374) target = $region48
        $region47: #{tpu_custom_call.1} parent=11 // pred_region
          _
        $region48: #{tpu_custom_call.1} parent=11 // pred_fallthru
          _
        // Predicated region
        $region49: #{tpu_custom_call.1} parent=11 // pred_check
          %p377 = pneg %p262
        $region50: #{tpu_custom_call.1} parent=11 // pred_check_branch
          %379 = sbr.rel (%p377) target = $region52
        $region51: #{tpu_custom_call.1} parent=11 // pred_region
          _
        $region52: #{tpu_custom_call.1} parent=11 // pred_fallthru
          _
        // Predicated region
        $region53: #{tpu_custom_call.1} parent=11 // pred_check
          %p380 = pneg %p283
        $region54: #{tpu_custom_call.1} parent=11 // pred_check_branch
          %382 = sbr.rel (%p380) target = $region56
        $region55: #{tpu_custom_call.1} parent=11 // pred_region
          _
        $region56: #{tpu_custom_call.1} parent=11 // pred_fallthru
          _
      $region12: #{tpu_custom_call.1} parent=5 // pred_fallthru
        _
      %p383 = scmp.lt.s32.totalorder %s26, 2
      // Predicated region
      $region57: #{tpu_custom_call.1} parent=5 // pred_check
        %p384 = pneg %p383
      $region58: #{tpu_custom_call.1} parent=5 // pred_check_branch
        %386 = sbr.rel (%p384) target = $region60
      $region59: #{tpu_custom_call.1} parent=5 // pred_region
        // Predicated region
        $region61: #{tpu_custom_call.1} parent=59 // pred_check
          %p387 = pneg %p46
        $region62: #{tpu_custom_call.1} parent=59 // pred_check_branch
          %389 = sbr.rel (%p387) target = $region64
        $region63: #{tpu_custom_call.1} parent=59 // pred_region
          %p390 = scmp.lt.s32.totalorder %s26, 1
          %s391 = scalar_select %p390, %s26, 1
          %s392 = smul.addr %s391, 8
          %s393 = scalar_lea.vmem %s0, %s392
        $region64: #{tpu_custom_call.1} parent=59 // pred_fallthru
          _
      $region60: #{tpu_custom_call.1} parent=5 // pred_fallthru
        _
      %p394 = scmp.le.s32.totalorder 1, %s26
      %p395 = scmp.lt.s32.totalorder %s26, 3
      %p396 = pnand %p394, %p395
      %p397 = pneg %p396
      // Predicated region
      $region65: #{tpu_custom_call.1} parent=5 // pred_check
        _
      $region66: #{tpu_custom_call.1} parent=5 // pred_check_branch
        %399 = sbr.rel (%p396) target = $region68
      $region67: #{tpu_custom_call.1} parent=5 // pred_region
        %s400 = ssub.s32 %s26, 1
        %p401 = scmp.lt.s32.totalorder %s31, 1
        %s402 = scalar_select %p401, %s31, 1
        %s403 = smul.addr %s402, 8
        %s404 = scalar_lea.vmem %s0, %s403
        %p405 = pneg %p52
        %p406 = pneg %p49
        %p407 = pneg %p73
        %p408 = pneg %p70
        %p409 = pneg %p94
        %p410 = pneg %p91
        %p411 = pneg %p115
        %p412 = pneg %p112
        %p413 = pneg %p136
        %p414 = pneg %p133
        %p415 = pneg %p157
        %p416 = pneg %p154
        %p417 = pneg %p178
        %p418 = pneg %p175
        %p419 = pneg %p199
        %p420 = pneg %p196
        %p421 = pneg %p220
        %p422 = pneg %p217
        %p423 = pneg %p241
        %p424 = pneg %p238
        %p425 = pneg %p262
        %p426 = pneg %p259
        %p427 = pneg %p283
        %p428 = pneg %p280
        %p429 = pneg %p309
        %p430 = pneg %p306
        %s431 = sand.u32 %s296, 1
        %s432 = scalar_lea.sflag [#allocation3], %s431
        %s433 = sand.u32 %s296, 1
        %s434 = smul.addr %s433, 8
        %s435 = scalar_lea.vmem [#allocation2], %s434
        %p436 = pneg %p335
        %p437 = pneg %p332
        %s438 = sand.u32 %s322, 1
        %s439 = scalar_lea.sflag [#allocation5], %s438
        %s440 = sand.u32 %s322, 1
        %s441 = smul.addr %s440, 32
        %s442 = scalar_lea.vmem [#allocation4], %s441
        %p443 = scmp.lt.s32.totalorder %s31, 1
        %s444 = scalar_select %p443, %s31, 1
        %s445 = smul.addr %s444, 8
        %s446 = scalar_lea.vmem %s0, %s445
        %v447 = vld [vmem:[%s446] sm:$0xff]
        %v448 = vld [vmem:[%s1] sm:$0x1]
        %v449 = vld [vmem:[%s2] sm:$0x1]
        %vm450 = vcmask 261120
        %v451 = vsel %vm450, %v447, 0.0
        %452 = vadd.xlane.f32.xlu0 %v451
        %v453 = vpop.xlane.xlu0 %452
        %v454 = vrcp.pop 32.0
        %v455 = vmul.f32 %v453, %v454
        %v456 = vsub.f32 %v447, %v455
        %v457 = vmul.f32 %v456, %v456
        %v458 = vsel %vm450, %v457, 0.0
        %459 = vadd.xlane.f32.xlu0 %v458
        %v460 = vpop.xlane.xlu0 %459
        %v461 = vmul.f32 %v460, %v454
        %v462 = vadd.f32 %v461, 1e-05
        %v463 = vrsqrt.pop %v462
        %v464 = vmul.f32 %v456, %v463
        %v466 = vlaneseq
        %v467 = vshrl.u32 %v466, 7
        %v468 = vsub.s32 0, %v467
        %v469 = vrot.slane %v448, %v468
        %v471 = vmul.f32 %v464, %v469
        %v473 = vlaneseq
        %v474 = vshrl.u32 %v473, 7
        %v475 = vsub.s32 0, %v474
        %v476 = vrot.slane %v449, %v475
        %v478 = vadd.f32 %v471, %v476
        %v479 = vld [vmem:[%s3] sm:$0xff]
        %v480 = vld [vmem:[%s3 + $0x8] sm:$0xff]
        %v481 = vld [vmem:[%s3 + $0x10] sm:$0xff]
        %v482 = vld [vmem:[%s3 + $0x18] sm:$0xff]
        %v483 = vld [vmem:[%s3 + $0x20] sm:$0xff]
        %v484 = vld [vmem:[%s3 + $0x28] sm:$0xff]
        %v485 = vld [vmem:[%s3 + $0x30] sm:$0xff]
        %v486 = vld [vmem:[%s3 + $0x38] sm:$0xff]
        %v487 = vld [vmem:[%s3 + $0x40] sm:$0xff]
        %v488 = vld [vmem:[%s3 + $0x48] sm:$0xff]
        %v489 = vld [vmem:[%s3 + $0x50] sm:$0xff]
        %v490 = vld [vmem:[%s3 + $0x58] sm:$0xff]
        %v491 = vld [vmem:[%s3 + $0x60] sm:$0xff]
        %v492 = vld [vmem:[%s3 + $0x68] sm:$0xff]
        %v493 = vld [vmem:[%s3 + $0x70] sm:$0xff]
        %v494 = vld [vmem:[%s3 + $0x78] sm:$0xff]
        %v495 = vld [vmem:[%s3 + $0x80] sm:$0xff]
        %v496 = vld [vmem:[%s3 + $0x88] sm:$0xff]
        %v497 = vld [vmem:[%s3 + $0x90] sm:$0xff]
        %v498 = vld [vmem:[%s3 + $0x98] sm:$0xff]
        %v499 = vld [vmem:[%s3 + $0xa0] sm:$0xff]
        %v500 = vld [vmem:[%s3 + $0xa8] sm:$0xff]
        %v501 = vld [vmem:[%s3 + $0xb0] sm:$0xff]
        %v502 = vld [vmem:[%s3 + $0xb8] sm:$0xff]
        %v503 = vld [vmem:[%s3 + $0xc0] sm:$0xff]
        %v504 = vld [vmem:[%s3 + $0xc8] sm:$0xff]
        %v505 = vld [vmem:[%s3 + $0xd0] sm:$0xff]
        %v506 = vld [vmem:[%s3 + $0xd8] sm:$0xff]
        %v507 = vld [vmem:[%s3 + $0xe0] sm:$0xff]
        %v508 = vld [vmem:[%s3 + $0xe8] sm:$0xff]
        %v509 = vld [vmem:[%s3 + $0xf0] sm:$0xff]
        %v510 = vld [vmem:[%s3 + $0xf8] sm:$0xff]
        %v511 = vld [vmem:[%s3 + $0x100] sm:$0xff]
        %v512 = vld [vmem:[%s3 + $0x108] sm:$0xff]
        %v513 = vld [vmem:[%s3 + $0x110] sm:$0xff]
        %v514 = vld [vmem:[%s3 + $0x118] sm:$0xff]
        %v515 = vld [vmem:[%s3 + $0x120] sm:$0xff]
        %v516 = vld [vmem:[%s3 + $0x128] sm:$0xff]
        %v517 = vld [vmem:[%s3 + $0x130] sm:$0xff]
        %v518 = vld [vmem:[%s3 + $0x138] sm:$0xff]
        %v519 = vld [vmem:[%s3 + $0x140] sm:$0xff]
        %v520 = vld [vmem:[%s3 + $0x148] sm:$0xff]
        %v521 = vld [vmem:[%s3 + $0x150] sm:$0xff]
        %v522 = vld [vmem:[%s3 + $0x158] sm:$0xff]
        %v523 = vld [vmem:[%s3 + $0x160] sm:$0xff]
        %v524 = vld [vmem:[%s3 + $0x168] sm:$0xff]
        %v525 = vld [vmem:[%s3 + $0x170] sm:$0xff]
        %v526 = vld [vmem:[%s3 + $0x178] sm:$0xff]
        %v528 = vsel %vm450, %v478, 0
        %530 = vmatprep.subr.mxu0 0.0
        %531 = vmatpush1.msra.mxu0 0.0
        %532 = vmatprep.subr.mxu0 0.0
        %533 = vmatpush1.msra.mxu0 0.0
        %534 = vmatprep.subr.mxu0 0.0
        %535 = vmatpush1.msra.mxu0 0.0
        %536 = vmatprep.subr.mxu0 0.0
        %537 = vmatpush1.msra.mxu0 0.0
        %538 = vmatprep.subr.mxu0 0.0
        %539 = vmatpush1.msra.mxu0 0.0
        %540 = vmatprep.subr.mxu0 0.0
        %541 = vmatpush1.msra.mxu0 0.0
        %542 = vmatprep.subr.mxu0 0.0
        %543 = vmatpush1.msra.mxu0 0.0
        %544 = vmatprep.subr.mxu0 0.0
        %545 = vmatpush1.msra.mxu0 0.0
        %546 = vmatprep.subr.mxu0 0.0
        %547 = vmatpush1.msra.mxu0 0.0
        %548 = vmatprep.subr.mxu0 0.0
        %549 = vmatpush1.msra.mxu0 0.0
        %550 = vmatprep.subr.mxu0 0.0
        %551 = vmatpush1.msra.mxu0 0.0
        %552 = vmatprep.subr.mxu0 0.0
        %553 = vmatpush1.msra.mxu0 0.0
        %554 = vmatprep.subr.mxu0 0.0
        %555 = vmatpush1.msra.mxu0 %v482
        %556 = vmatprep.subr.mxu0 0.0
        %557 = vmatpush1.msra.mxu0 %v481
        %558 = vmatprep.subr.mxu0 0.0
        %559 = vmatpush1.msra.mxu0 %v480
        %560 = vmatprep.subr.mxu0 0.0
        %561 = vmatpush1.msra.mxu0 %v479
        %562 = vmatprep.subr.mxu0 0.0
        %563 = vmatpush2.msra.mxu0 0.0
        %564 = vmatprep.subr.mxu0 0.0
        %565 = vmatpush2.msra.mxu0 0.0
        %566 = vmatprep.subr.mxu0 0.0
        %567 = vmatpush2.msra.mxu0 0.0
        %568 = vmatprep.subr.mxu0 0.0
        %569 = vmatpush2.msra.mxu0 0.0
        %570 = vmatprep.subr.mxu0 0.0
        %571 = vmatpush2.msra.mxu0 0.0
        %572 = vmatprep.subr.mxu0 0.0
        %573 = vmatpush2.msra.mxu0 0.0
        %574 = vmatprep.subr.mxu0 0.0
        %575 = vmatpush2.msra.mxu0 0.0
        %576 = vmatprep.subr.mxu0 0.0
        %577 = vmatpush2.msra.mxu0 0.0
        %578 = vmatprep.subr.mxu0 0.0
        %579 = vmatpush2.msra.mxu0 0.0
        %580 = vmatprep.subr.mxu0 0.0
        %581 = vmatpush2.msra.mxu0 0.0
        %582 = vmatprep.subr.mxu0 0.0
        %583 = vmatpush2.msra.mxu0 0.0
        %584 = vmatprep.subr.mxu0 0.0
        %585 = vmatpush2.msra.mxu0 0.0
        %586 = vmatprep.subr.mxu0 0.0
        %587 = vmatpush2.msra.mxu0 0.0
        %588 = vmatprep.subr.mxu0 0.0
        %589 = vmatpush2.msra.mxu0 0.0
        %590 = vmatprep.subr.mxu0 0.0
        %591 = vmatpush2.msra.mxu0 0.0
        %592 = vmatprep.subr.mxu0 0.0
        %593 = vmatpush2.msra.mxu0 0.0
        %594 = vmatprep.mubr.f32.mxu0 0.0
        %595 = vmatmul.mubr.f32.gmra.mxu0 %v528
        %v596 = vpop.f32.mrf.mxu0
        %v597 = vadd.f32 0.0, %v596
        %v598 = vpop.f32.mrf.mxu0
        %599 = vdwg.mxu0
        %600 = vmatprep.subr.mxu0 0.0
        %601 = vmatpush1.msra.mxu0 0.0
        %602 = vmatprep.subr.mxu0 0.0
        %603 = vmatpush1.msra.mxu0 0.0
        %604 = vmatprep.subr.mxu0 0.0
        %605 = vmatpush1.msra.mxu0 0.0
        %606 = vmatprep.subr.mxu0 0.0
        %607 = vmatpush1.msra.mxu0 0.0
        %608 = vmatprep.subr.mxu0 0.0
        %609 = vmatpush1.msra.mxu0 0.0
        %610 = vmatprep.subr.mxu0 0.0
        %611 = vmatpush1.msra.mxu0 0.0
        %612 = vmatprep.subr.mxu0 0.0
        %613 = vmatpush1.msra.mxu0 0.0
        %614 = vmatprep.subr.mxu0 0.0
        %615 = vmatpush1.msra.mxu0 0.0
        %616 = vmatprep.subr.mxu0 0.0
        %617 = vmatpush1.msra.mxu0 0.0
        %618 = vmatprep.subr.mxu0 0.0
        %619 = vmatpush1.msra.mxu0 0.0
        %620 = vmatprep.subr.mxu0 0.0
        %621 = vmatpush1.msra.mxu0 0.0
        %622 = vmatprep.subr.mxu0 0.0
        %623 = vmatpush1.msra.mxu0 0.0
        %624 = vmatprep.subr.mxu0 0.0
        %625 = vmatpush1.msra.mxu0 %v486
        %626 = vmatprep.subr.mxu0 0.0
        %627 = vmatpush1.msra.mxu0 %v485
        %628 = vmatprep.subr.mxu0 0.0
        %629 = vmatpush1.msra.mxu0 %v484
        %630 = vmatprep.subr.mxu0 0.0
        %631 = vmatpush1.msra.mxu0 %v483
        %632 = vmatprep.subr.mxu0 0.0
        %633 = vmatpush2.msra.mxu0 0.0
        %634 = vmatprep.subr.mxu0 0.0
        %635 = vmatpush2.msra.mxu0 0.0
        %636 = vmatprep.subr.mxu0 0.0
        %637 = vmatpush2.msra.mxu0 0.0
        %638 = vmatprep.subr.mxu0 0.0
        %639 = vmatpush2.msra.mxu0 0.0
        %640 = vmatprep.subr.mxu0 0.0
        %641 = vmatpush2.msra.mxu0 0.0
        %642 = vmatprep.subr.mxu0 0.0
        %643 = vmatpush2.msra.mxu0 0.0
        %644 = vmatprep.subr.mxu0 0.0
        %645 = vmatpush2.msra.mxu0 0.0
        %646 = vmatprep.subr.mxu0 0.0
        %647 = vmatpush2.msra.mxu0 0.0
        %648 = vmatprep.subr.mxu0 0.0
        %649 = vmatpush2.msra.mxu0 0.0
        %650 = vmatprep.subr.mxu0 0.0
        %651 = vmatpush2.msra.mxu0 0.0
        %652 = vmatprep.subr.mxu0 0.0
        %653 = vmatpush2.msra.mxu0 0.0
        %654 = vmatprep.subr.mxu0 0.0
        %655 = vmatpush2.msra.mxu0 0.0
        %656 = vmatprep.subr.mxu0 0.0
        %657 = vmatpush2.msra.mxu0 0.0
        %658 = vmatprep.subr.mxu0 0.0
        %659 = vmatpush2.msra.mxu0 0.0
        %660 = vmatprep.subr.mxu0 0.0
        %661 = vmatpush2.msra.mxu0 0.0
        %662 = vmatprep.subr.mxu0 0.0
        %663 = vmatpush2.msra.mxu0 0.0
        %664 = vmatprep.mubr.f32.mxu0 0.0
        %665 = vmatmul.mubr.f32.gmra.mxu0 %v528
        %v666 = vpop.f32.mrf.mxu0
        %v667 = vadd.f32 0.0, %v666
        %v668 = vpop.f32.mrf.mxu0
        %669 = vdwg.mxu0
        %670 = vmatprep.subr.mxu0 0.0
        %671 = vmatpush1.msra.mxu0 0.0
        %672 = vmatprep.subr.mxu0 0.0
        %673 = vmatpush1.msra.mxu0 0.0
        %674 = vmatprep.subr.mxu0 0.0
        %675 = vmatpush1.msra.mxu0 0.0
        %676 = vmatprep.subr.mxu0 0.0
        %677 = vmatpush1.msra.mxu0 0.0
        %678 = vmatprep.subr.mxu0 0.0
        %679 = vmatpush1.msra.mxu0 0.0
        %680 = vmatprep.subr.mxu0 0.0
        %681 = vmatpush1.msra.mxu0 0.0
        %682 = vmatprep.subr.mxu0 0.0
        %683 = vmatpush1.msra.mxu0 0.0
        %684 = vmatprep.subr.mxu0 0.0
        %685 = vmatpush1.msra.mxu0 0.0
        %686 = vmatprep.subr.mxu0 0.0
        %687 = vmatpush1.msra.mxu0 0.0
        %688 = vmatprep.subr.mxu0 0.0
        %689 = vmatpush1.msra.mxu0 0.0
        %690 = vmatprep.subr.mxu0 0.0
        %691 = vmatpush1.msra.mxu0 0.0
        %692 = vmatprep.subr.mxu0 0.0
        %693 = vmatpush1.msra.mxu0 0.0
        %694 = vmatprep.subr.mxu0 0.0
        %695 = vmatpush1.msra.mxu0 %v490
        %696 = vmatprep.subr.mxu0 0.0
        %697 = vmatpush1.msra.mxu0 %v489
        %698 = vmatprep.subr.mxu0 0.0
        %699 = vmatpush1.msra.mxu0 %v488
        %700 = vmatprep.subr.mxu0 0.0
        %701 = vmatpush1.msra.mxu0 %v487
        %702 = vmatprep.subr.mxu0 0.0
        %703 = vmatpush2.msra.mxu0 0.0
        %704 = vmatprep.subr.mxu0 0.0
        %705 = vmatpush2.msra.mxu0 0.0
        %706 = vmatprep.subr.mxu0 0.0
        %707 = vmatpush2.msra.mxu0 0.0
        %708 = vmatprep.subr.mxu0 0.0
        %709 = vmatpush2.msra.mxu0 0.0
        %710 = vmatprep.subr.mxu0 0.0
        %711 = vmatpush2.msra.mxu0 0.0
        %712 = vmatprep.subr.mxu0 0.0
        %713 = vmatpush2.msra.mxu0 0.0
        %714 = vmatprep.subr.mxu0 0.0
        %715 = vmatpush2.msra.mxu0 0.0
        %716 = vmatprep.subr.mxu0 0.0
        %717 = vmatpush2.msra.mxu0 0.0
        %718 = vmatprep.subr.mxu0 0.0
        %719 = vmatpush2.msra.mxu0 0.0
        %720 = vmatprep.subr.mxu0 0.0
        %721 = vmatpush2.msra.mxu0 0.0
        %722 = vmatprep.subr.mxu0 0.0
        %723 = vmatpush2.msra.mxu0 0.0
        %724 = vmatprep.subr.mxu0 0.0
        %725 = vmatpush2.msra.mxu0 0.0
        %726 = vmatprep.subr.mxu0 0.0
        %727 = vmatpush2.msra.mxu0 0.0
        %728 = vmatprep.subr.mxu0 0.0
        %729 = vmatpush2.msra.mxu0 0.0
        %730 = vmatprep.subr.mxu0 0.0
        %731 = vmatpush2.msra.mxu0 0.0
        %732 = vmatprep.subr.mxu0 0.0
        %733 = vmatpush2.msra.mxu0 0.0
        %734 = vmatprep.mubr.f32.mxu0 0.0
        %735 = vmatmul.mubr.f32.gmra.mxu0 %v528
        %v736 = vpop.f32.mrf.mxu0
        %v737 = vadd.f32 0.0, %v736
        %v738 = vpop.f32.mrf.mxu0
        %739 = vdwg.mxu0
        %740 = vmatprep.subr.mxu0 0.0
        %741 = vmatpush1.msra.mxu0 0.0
        %742 = vmatprep.subr.mxu0 0.0
        %743 = vmatpush1.msra.mxu0 0.0
        %744 = vmatprep.subr.mxu0 0.0
        %745 = vmatpush1.msra.mxu0 0.0
        %746 = vmatprep.subr.mxu0 0.0
        %747 = vmatpush1.msra.mxu0 0.0
        %748 = vmatprep.subr.mxu0 0.0
        %749 = vmatpush1.msra.mxu0 0.0
        %750 = vmatprep.subr.mxu0 0.0
        %751 = vmatpush1.msra.mxu0 0.0
        %752 = vmatprep.subr.mxu0 0.0
        %753 = vmatpush1.msra.mxu0 0.0
        %754 = vmatprep.subr.mxu0 0.0
        %755 = vmatpush1.msra.mxu0 0.0
        %756 = vmatprep.subr.mxu0 0.0
        %757 = vmatpush1.msra.mxu0 0.0
        %758 = vmatprep.subr.mxu0 0.0
        %759 = vmatpush1.msra.mxu0 0.0
        %760 = vmatprep.subr.mxu0 0.0
        %761 = vmatpush1.msra.mxu0 0.0
        %762 = vmatprep.subr.mxu0 0.0
        %763 = vmatpush1.msra.mxu0 0.0
        %764 = vmatprep.subr.mxu0 0.0
        %765 = vmatpush1.msra.mxu0 %v494
        %766 = vmatprep.subr.mxu0 0.0
        %767 = vmatpush1.msra.mxu0 %v493
        %768 = vmatprep.subr.mxu0 0.0
        %769 = vmatpush1.msra.mxu0 %v492
        %770 = vmatprep.subr.mxu0 0.0
        %771 = vmatpush1.msra.mxu0 %v491
        %772 = vmatprep.subr.mxu0 0.0
        %773 = vmatpush2.msra.mxu0 0.0
        %774 = vmatprep.subr.mxu0 0.0
        %775 = vmatpush2.msra.mxu0 0.0
        %776 = vmatprep.subr.mxu0 0.0
        %777 = vmatpush2.msra.mxu0 0.0
        %778 = vmatprep.subr.mxu0 0.0
        %779 = vmatpush2.msra.mxu0 0.0
        %780 = vmatprep.subr.mxu0 0.0
        %781 = vmatpush2.msra.mxu0 0.0
        %782 = vmatprep.subr.mxu0 0.0
        %783 = vmatpush2.msra.mxu0 0.0
        %784 = vmatprep.subr.mxu0 0.0
        %785 = vmatpush2.msra.mxu0 0.0
        %786 = vmatprep.subr.mxu0 0.0
        %787 = vmatpush2.msra.mxu0 0.0
        %788 = vmatprep.subr.mxu0 0.0
        %789 = vmatpush2.msra.mxu0 0.0
        %790 = vmatprep.subr.mxu0 0.0
        %791 = vmatpush2.msra.mxu0 0.0
        %792 = vmatprep.subr.mxu0 0.0
        %793 = vmatpush2.msra.mxu0 0.0
        %794 = vmatprep.subr.mxu0 0.0
        %795 = vmatpush2.msra.mxu0 0.0
        %796 = vmatprep.subr.mxu0 0.0
        %797 = vmatpush2.msra.mxu0 0.0
        %798 = vmatprep.subr.mxu0 0.0
        %799 = vmatpush2.msra.mxu0 0.0
        %800 = vmatprep.subr.mxu0 0.0
        %801 = vmatpush2.msra.mxu0 0.0
        %802 = vmatprep.subr.mxu0 0.0
        %803 = vmatpush2.msra.mxu0 0.0
        %804 = vmatprep.mubr.f32.mxu0 0.0
        %805 = vmatmul.mubr.f32.gmra.mxu0 %v528
        %v806 = vpop.f32.mrf.mxu0
        %v807 = vadd.f32 0.0, %v806
        %v808 = vpop.f32.mrf.mxu0
        %809 = vdwg.mxu0
        %810 = vmatprep.subr.mxu0 0.0
        %811 = vmatpush1.msra.mxu0 0.0
        %812 = vmatprep.subr.mxu0 0.0
        %813 = vmatpush1.msra.mxu0 0.0
        %814 = vmatprep.subr.mxu0 0.0
        %815 = vmatpush1.msra.mxu0 0.0
        %816 = vmatprep.subr.mxu0 0.0
        %817 = vmatpush1.msra.mxu0 0.0
        %818 = vmatprep.subr.mxu0 0.0
        %819 = vmatpush1.msra.mxu0 0.0
        %820 = vmatprep.subr.mxu0 0.0
        %821 = vmatpush1.msra.mxu0 0.0
        %822 = vmatprep.subr.mxu0 0.0
        %823 = vmatpush1.msra.mxu0 0.0
        %824 = vmatprep.subr.mxu0 0.0
        %825 = vmatpush1.msra.mxu0 0.0
        %826 = vmatprep.subr.mxu0 0.0
        %827 = vmatpush1.msra.mxu0 0.0
        %828 = vmatprep.subr.mxu0 0.0
        %829 = vmatpush1.msra.mxu0 0.0
        %830 = vmatprep.subr.mxu0 0.0
        %831 = vmatpush1.msra.mxu0 0.0
        %832 = vmatprep.subr.mxu0 0.0
        %833 = vmatpush1.msra.mxu0 0.0
        %834 = vmatprep.subr.mxu0 0.0
        %835 = vmatpush1.msra.mxu0 %v498
        %836 = vmatprep.subr.mxu0 0.0
        %837 = vmatpush1.msra.mxu0 %v497
        %838 = vmatprep.subr.mxu0 0.0
        %839 = vmatpush1.msra.mxu0 %v496
        %840 = vmatprep.subr.mxu0 0.0
        %841 = vmatpush1.msra.mxu0 %v495
        %842 = vmatprep.subr.mxu0 0.0
        %843 = vmatpush2.msra.mxu0 0.0
        %844 = vmatprep.subr.mxu0 0.0
        %845 = vmatpush2.msra.mxu0 0.0
        %846 = vmatprep.subr.mxu0 0.0
        %847 = vmatpush2.msra.mxu0 0.0
        %848 = vmatprep.subr.mxu0 0.0
        %849 = vmatpush2.msra.mxu0 0.0
        %850 = vmatprep.subr.mxu0 0.0
        %851 = vmatpush2.msra.mxu0 0.0
        %852 = vmatprep.subr.mxu0 0.0
        %853 = vmatpush2.msra.mxu0 0.0
        %854 = vmatprep.subr.mxu0 0.0
        %855 = vmatpush2.msra.mxu0 0.0
        %856 = vmatprep.subr.mxu0 0.0
        %857 = vmatpush2.msra.mxu0 0.0
        %858 = vmatprep.subr.mxu0 0.0
        %859 = vmatpush2.msra.mxu0 0.0
        %860 = vmatprep.subr.mxu0 0.0
        %861 = vmatpush2.msra.mxu0 0.0
        %862 = vmatprep.subr.mxu0 0.0
        %863 = vmatpush2.msra.mxu0 0.0
        %864 = vmatprep.subr.mxu0 0.0
        %865 = vmatpush2.msra.mxu0 0.0
        %866 = vmatprep.subr.mxu0 0.0
        %867 = vmatpush2.msra.mxu0 0.0
        %868 = vmatprep.subr.mxu0 0.0
        %869 = vmatpush2.msra.mxu0 0.0
        %870 = vmatprep.subr.mxu0 0.0
        %871 = vmatpush2.msra.mxu0 0.0
        %872 = vmatprep.subr.mxu0 0.0
        %873 = vmatpush2.msra.mxu0 0.0
        %874 = vmatprep.mubr.f32.mxu0 0.0
        %875 = vmatmul.mubr.f32.gmra.mxu0 %v528
        %v876 = vpop.f32.mrf.mxu0
        %v877 = vadd.f32 0.0, %v876
        %v878 = vpop.f32.mrf.mxu0
        %879 = vdwg.mxu0
        %880 = vmatprep.subr.mxu0 0.0
        %881 = vmatpush1.msra.mxu0 0.0
        %882 = vmatprep.subr.mxu0 0.0
        %883 = vmatpush1.msra.mxu0 0.0
        %884 = vmatprep.subr.mxu0 0.0
        %885 = vmatpush1.msra.mxu0 0.0
        %886 = vmatprep.subr.mxu0 0.0
        %887 = vmatpush1.msra.mxu0 0.0
        %888 = vmatprep.subr.mxu0 0.0
        %889 = vmatpush1.msra.mxu0 0.0
        %890 = vmatprep.subr.mxu0 0.0
        %891 = vmatpush1.msra.mxu0 0.0
        %892 = vmatprep.subr.mxu0 0.0
        %893 = vmatpush1.msra.mxu0 0.0
        %894 = vmatprep.subr.mxu0 0.0
        %895 = vmatpush1.msra.mxu0 0.0
        %896 = vmatprep.subr.mxu0 0.0
        %897 = vmatpush1.msra.mxu0 0.0
        %898 = vmatprep.subr.mxu0 0.0
        %899 = vmatpush1.msra.mxu0 0.0
        %900 = vmatprep.subr.mxu0 0.0
        %901 = vmatpush1.msra.mxu0 0.0
        %902 = vmatprep.subr.mxu0 0.0
        %903 = vmatpush1.msra.mxu0 0.0
        %904 = vmatprep.subr.mxu0 0.0
        %905 = vmatpush1.msra.mxu0 %v502
        %906 = vmatprep.subr.mxu0 0.0
        %907 = vmatpush1.msra.mxu0 %v501
        %908 = vmatprep.subr.mxu0 0.0
        %909 = vmatpush1.msra.mxu0 %v500
        %910 = vmatprep.subr.mxu0 0.0
        %911 = vmatpush1.msra.mxu0 %v499
        %912 = vmatprep.subr.mxu0 0.0
        %913 = vmatpush2.msra.mxu0 0.0
        %914 = vmatprep.subr.mxu0 0.0
        %915 = vmatpush2.msra.mxu0 0.0
        %916 = vmatprep.subr.mxu0 0.0
        %917 = vmatpush2.msra.mxu0 0.0
        %918 = vmatprep.subr.mxu0 0.0
        %919 = vmatpush2.msra.mxu0 0.0
        %920 = vmatprep.subr.mxu0 0.0
        %921 = vmatpush2.msra.mxu0 0.0
        %922 = vmatprep.subr.mxu0 0.0
        %923 = vmatpush2.msra.mxu0 0.0
        %924 = vmatprep.subr.mxu0 0.0
        %925 = vmatpush2.msra.mxu0 0.0
        %926 = vmatprep.subr.mxu0 0.0
        %927 = vmatpush2.msra.mxu0 0.0
        %928 = vmatprep.subr.mxu0 0.0
        %929 = vmatpush2.msra.mxu0 0.0
        %930 = vmatprep.subr.mxu0 0.0
        %931 = vmatpush2.msra.mxu0 0.0
        %932 = vmatprep.subr.mxu0 0.0
        %933 = vmatpush2.msra.mxu0 0.0
        %934 = vmatprep.subr.mxu0 0.0
        %935 = vmatpush2.msra.mxu0 0.0
        %936 = vmatprep.subr.mxu0 0.0
        %937 = vmatpush2.msra.mxu0 0.0
        %938 = vmatprep.subr.mxu0 0.0
        %939 = vmatpush2.msra.mxu0 0.0
        %940 = vmatprep.subr.mxu0 0.0
        %941 = vmatpush2.msra.mxu0 0.0
        %942 = vmatprep.subr.mxu0 0.0
        %943 = vmatpush2.msra.mxu0 0.0
        %944 = vmatprep.mubr.f32.mxu0 0.0
        %945 = vmatmul.mubr.f32.gmra.mxu0 %v528
        %v946 = vpop.f32.mrf.mxu0
        %v947 = vadd.f32 0.0, %v946
        %v948 = vpop.f32.mrf.mxu0
        %949 = vdwg.mxu0
        %950 = vmatprep.subr.mxu0 0.0
        %951 = vmatpush1.msra.mxu0 0.0
        %952 = vmatprep.subr.mxu0 0.0
        %953 = vmatpush1.msra.mxu0 0.0
        %954 = vmatprep.subr.mxu0 0.0
        %955 = vmatpush1.msra.mxu0 0.0
        %956 = vmatprep.subr.mxu0 0.0
        %957 = vmatpush1.msra.mxu0 0.0
        %958 = vmatprep.subr.mxu0 0.0
        %959 = vmatpush1.msra.mxu0 0.0
        %960 = vmatprep.subr.mxu0 0.0
        %961 = vmatpush1.msra.mxu0 0.0
        %962 = vmatprep.subr.mxu0 0.0
        %963 = vmatpush1.msra.mxu0 0.0
        %964 = vmatprep.subr.mxu0 0.0
        %965 = vmatpush1.msra.mxu0 0.0
        %966 = vmatprep.subr.mxu0 0.0
        %967 = vmatpush1.msra.mxu0 0.0
        %968 = vmatprep.subr.mxu0 0.0
        %969 = vmatpush1.msra.mxu0 0.0
        %970 = vmatprep.subr.mxu0 0.0
        %971 = vmatpush1.msra.mxu0 0.0
        %972 = vmatprep.subr.mxu0 0.0
        %973 = vmatpush1.msra.mxu0 0.0
        %974 = vmatprep.subr.mxu0 0.0
        %975 = vmatpush1.msra.mxu0 %v506
        %976 = vmatprep.subr.mxu0 0.0
        %977 = vmatpush1.msra.mxu0 %v505
        %978 = vmatprep.subr.mxu0 0.0
        %979 = vmatpush1.msra.mxu0 %v504
        %980 = vmatprep.subr.mxu0 0.0
        %981 = vmatpush1.msra.mxu0 %v503
        %982 = vmatprep.subr.mxu0 0.0
        %983 = vmatpush2.msra.mxu0 0.0
        %984 = vmatprep.subr.mxu0 0.0
        %985 = vmatpush2.msra.mxu0 0.0
        %986 = vmatprep.subr.mxu0 0.0
        %987 = vmatpush2.msra.mxu0 0.0
        %988 = vmatprep.subr.mxu0 0.0
        %989 = vmatpush2.msra.mxu0 0.0
        %990 = vmatprep.subr.mxu0 0.0
        %991 = vmatpush2.msra.mxu0 0.0
        %992 = vmatprep.subr.mxu0 0.0
        %993 = vmatpush2.msra.mxu0 0.0
        %994 = vmatprep.subr.mxu0 0.0
        %995 = vmatpush2.msra.mxu0 0.0
        %996 = vmatprep.subr.mxu0 0.0
        %997 = vmatpush2.msra.mxu0 0.0
        %998 = vmatprep.subr.mxu0 0.0
        %999 = vmatpush2.msra.mxu0 0.0
        %1000 = vmatprep.subr.mxu0 0.0
        %1001 = vmatpush2.msra.mxu0 0.0
        %1002 = vmatprep.subr.mxu0 0.0
        %1003 = vmatpush2.msra.mxu0 0.0
        %1004 = vmatprep.subr.mxu0 0.0
        %1005 = vmatpush2.msra.mxu0 0.0
        %1006 = vmatprep.subr.mxu0 0.0
        %1007 = vmatpush2.msra.mxu0 0.0
        %1008 = vmatprep.subr.mxu0 0.0
        %1009 = vmatpush2.msra.mxu0 0.0
        %1010 = vmatprep.subr.mxu0 0.0
        %1011 = vmatpush2.msra.mxu0 0.0
        %1012 = vmatprep.subr.mxu0 0.0
        %1013 = vmatpush2.msra.mxu0 0.0
        %1014 = vmatprep.mubr.f32.mxu0 0.0
        %1015 = vmatmul.mubr.f32.gmra.mxu0 %v528
        %v1016 = vpop.f32.mrf.mxu0
        %v1017 = vadd.f32 0.0, %v1016
        %v1018 = vpop.f32.mrf.mxu0
        %1019 = vdwg.mxu0
        %1020 = vmatprep.subr.mxu0 0.0
        %1021 = vmatpush1.msra.mxu0 0.0
        %1022 = vmatprep.subr.mxu0 0.0
        %1023 = vmatpush1.msra.mxu0 0.0
        %1024 = vmatprep.subr.mxu0 0.0
        %1025 = vmatpush1.msra.mxu0 0.0
        %1026 = vmatprep.subr.mxu0 0.0
        %1027 = vmatpush1.msra.mxu0 0.0
        %1028 = vmatprep.subr.mxu0 0.0
        %1029 = vmatpush1.msra.mxu0 0.0
        %1030 = vmatprep.subr.mxu0 0.0
        %1031 = vmatpush1.msra.mxu0 0.0
        %1032 = vmatprep.subr.mxu0 0.0
        %1033 = vmatpush1.msra.mxu0 0.0
        %1034 = vmatprep.subr.mxu0 0.0
        %1035 = vmatpush1.msra.mxu0 0.0
        %1036 = vmatprep.subr.mxu0 0.0
        %1037 = vmatpush1.msra.mxu0 0.0
        %1038 = vmatprep.subr.mxu0 0.0
        %1039 = vmatpush1.msra.mxu0 0.0
        %1040 = vmatprep.subr.mxu0 0.0
        %1041 = vmatpush1.msra.mxu0 0.0
        %1042 = vmatprep.subr.mxu0 0.0
        %1043 = vmatpush1.msra.mxu0 0.0
        %1044 = vmatprep.subr.mxu0 0.0
        %1045 = vmatpush1.msra.mxu0 %v510
        %1046 = vmatprep.subr.mxu0 0.0
        %1047 = vmatpush1.msra.mxu0 %v509
        %1048 = vmatprep.subr.mxu0 0.0
        %1049 = vmatpush1.msra.mxu0 %v508
        %1050 = vmatprep.subr.mxu0 0.0
        %1051 = vmatpush1.msra.mxu0 %v507
        %1052 = vmatprep.subr.mxu0 0.0
        %1053 = vmatpush2.msra.mxu0 0.0
        %1054 = vmatprep.subr.mxu0 0.0
        %1055 = vmatpush2.msra.mxu0 0.0
        %1056 = vmatprep.subr.mxu0 0.0
        %1057 = vmatpush2.msra.mxu0 0.0
        %1058 = vmatprep.subr.mxu0 0.0
        %1059 = vmatpush2.msra.mxu0 0.0
        %1060 = vmatprep.subr.mxu0 0.0
        %1061 = vmatpush2.msra.mxu0 0.0
        %1062 = vmatprep.subr.mxu0 0.0
        %1063 = vmatpush2.msra.mxu0 0.0
        %1064 = vmatprep.subr.mxu0 0.0
        %1065 = vmatpush2.msra.mxu0 0.0
        %1066 = vmatprep.subr.mxu0 0.0
        %1067 = vmatpush2.msra.mxu0 0.0
        %1068 = vmatprep.subr.mxu0 0.0
        %1069 = vmatpush2.msra.mxu0 0.0
        %1070 = vmatprep.subr.mxu0 0.0
        %1071 = vmatpush2.msra.mxu0 0.0
        %1072 = vmatprep.subr.mxu0 0.0
        %1073 = vmatpush2.msra.mxu0 0.0
        %1074 = vmatprep.subr.mxu0 0.0
        %1075 = vmatpush2.msra.mxu0 0.0
        %1076 = vmatprep.subr.mxu0 0.0
        %1077 = vmatpush2.msra.mxu0 0.0
        %1078 = vmatprep.subr.mxu0 0.0
        %1079 = vmatpush2.msra.mxu0 0.0
        %1080 = vmatprep.subr.mxu0 0.0
        %1081 = vmatpush2.msra.mxu0 0.0
        %1082 = vmatprep.subr.mxu0 0.0
        %1083 = vmatpush2.msra.mxu0 0.0
        %1084 = vmatprep.mubr.f32.mxu0 0.0
        %1085 = vmatmul.mubr.f32.gmra.mxu0 %v528
        %v1086 = vpop.f32.mrf.mxu0
        %v1087 = vadd.f32 0.0, %v1086
        %v1088 = vpop.f32.mrf.mxu0
        %1089 = vdwg.mxu0
        %1090 = vmatprep.subr.mxu0 0.0
        %1091 = vmatpush1.msra.mxu0 0.0
        %1092 = vmatprep.subr.mxu0 0.0
        %1093 = vmatpush1.msra.mxu0 0.0
        %1094 = vmatprep.subr.mxu0 0.0
        %1095 = vmatpush1.msra.mxu0 0.0
        %1096 = vmatprep.subr.mxu0 0.0
        %1097 = vmatpush1.msra.mxu0 0.0
        %1098 = vmatprep.subr.mxu0 0.0
        %1099 = vmatpush1.msra.mxu0 0.0
        %1100 = vmatprep.subr.mxu0 0.0
        %1101 = vmatpush1.msra.mxu0 0.0
        %1102 = vmatprep.subr.mxu0 0.0
        %1103 = vmatpush1.msra.mxu0 0.0
        %1104 = vmatprep.subr.mxu0 0.0
        %1105 = vmatpush1.msra.mxu0 0.0
        %1106 = vmatprep.subr.mxu0 0.0
        %1107 = vmatpush1.msra.mxu0 0.0
        %1108 = vmatprep.subr.mxu0 0.0
        %1109 = vmatpush1.msra.mxu0 0.0
        %1110 = vmatprep.subr.mxu0 0.0
        %1111 = vmatpush1.msra.mxu0 0.0
        %1112 = vmatprep.subr.mxu0 0.0
        %1113 = vmatpush1.msra.mxu0 0.0
        %1114 = vmatprep.subr.mxu0 0.0
        %1115 = vmatpush1.msra.mxu0 %v514
        %1116 = vmatprep.subr.mxu0 0.0
        %1117 = vmatpush1.msra.mxu0 %v513
        %1118 = vmatprep.subr.mxu0 0.0
        %1119 = vmatpush1.msra.mxu0 %v512
        %1120 = vmatprep.subr.mxu0 0.0
        %1121 = vmatpush1.msra.mxu0 %v511
        %1122 = vmatprep.subr.mxu0 0.0
        %1123 = vmatpush2.msra.mxu0 0.0
        %1124 = vmatprep.subr.mxu0 0.0
        %1125 = vmatpush2.msra.mxu0 0.0
        %1126 = vmatprep.subr.mxu0 0.0
        %1127 = vmatpush2.msra.mxu0 0.0
        %1128 = vmatprep.subr.mxu0 0.0
        %1129 = vmatpush2.msra.mxu0 0.0
        %1130 = vmatprep.subr.mxu0 0.0
        %1131 = vmatpush2.msra.mxu0 0.0
        %1132 = vmatprep.subr.mxu0 0.0
        %1133 = vmatpush2.msra.mxu0 0.0
        %1134 = vmatprep.subr.mxu0 0.0
        %1135 = vmatpush2.msra.mxu0 0.0
        %1136 = vmatprep.subr.mxu0 0.0
        %1137 = vmatpush2.msra.mxu0 0.0
        %1138 = vmatprep.subr.mxu0 0.0
        %1139 = vmatpush2.msra.mxu0 0.0
        %1140 = vmatprep.subr.mxu0 0.0
        %1141 = vmatpush2.msra.mxu0 0.0
        %1142 = vmatprep.subr.mxu0 0.0
        %1143 = vmatpush2.msra.mxu0 0.0
        %1144 = vmatprep.subr.mxu0 0.0
        %1145 = vmatpush2.msra.mxu0 0.0
        %1146 = vmatprep.subr.mxu0 0.0
        %1147 = vmatpush2.msra.mxu0 0.0
        %1148 = vmatprep.subr.mxu0 0.0
        %1149 = vmatpush2.msra.mxu0 0.0
        %1150 = vmatprep.subr.mxu0 0.0
        %1151 = vmatpush2.msra.mxu0 0.0
        %1152 = vmatprep.subr.mxu0 0.0
        %1153 = vmatpush2.msra.mxu0 0.0
        %1154 = vmatprep.mubr.f32.mxu0 0.0
        %1155 = vmatmul.mubr.f32.gmra.mxu0 %v528
        %v1156 = vpop.f32.mrf.mxu0
        %v1157 = vadd.f32 0.0, %v1156
        %v1158 = vpop.f32.mrf.mxu0
        %1159 = vdwg.mxu0
        %1160 = vmatprep.subr.mxu0 0.0
        %1161 = vmatpush1.msra.mxu0 0.0
        %1162 = vmatprep.subr.mxu0 0.0
        %1163 = vmatpush1.msra.mxu0 0.0
        %1164 = vmatprep.subr.mxu0 0.0
        %1165 = vmatpush1.msra.mxu0 0.0
        %1166 = vmatprep.subr.mxu0 0.0
        %1167 = vmatpush1.msra.mxu0 0.0
        %1168 = vmatprep.subr.mxu0 0.0
        %1169 = vmatpush1.msra.mxu0 0.0
        %1170 = vmatprep.subr.mxu0 0.0
        %1171 = vmatpush1.msra.mxu0 0.0
        %1172 = vmatprep.subr.mxu0 0.0
        %1173 = vmatpush1.msra.mxu0 0.0
        %1174 = vmatprep.subr.mxu0 0.0
        %1175 = vmatpush1.msra.mxu0 0.0
        %1176 = vmatprep.subr.mxu0 0.0
        %1177 = vmatpush1.msra.mxu0 0.0
        %1178 = vmatprep.subr.mxu0 0.0
        %1179 = vmatpush1.msra.mxu0 0.0
        %1180 = vmatprep.subr.mxu0 0.0
        %1181 = vmatpush1.msra.mxu0 0.0
        %1182 = vmatprep.subr.mxu0 0.0
        %1183 = vmatpush1.msra.mxu0 0.0
        %1184 = vmatprep.subr.mxu0 0.0
        %1185 = vmatpush1.msra.mxu0 %v518
        %1186 = vmatprep.subr.mxu0 0.0
        %1187 = vmatpush1.msra.mxu0 %v517
        %1188 = vmatprep.subr.mxu0 0.0
        %1189 = vmatpush1.msra.mxu0 %v516
        %1190 = vmatprep.subr.mxu0 0.0
        %1191 = vmatpush1.msra.mxu0 %v515
        %1192 = vmatprep.subr.mxu0 0.0
        %1193 = vmatpush2.msra.mxu0 0.0
        %1194 = vmatprep.subr.mxu0 0.0
        %1195 = vmatpush2.msra.mxu0 0.0
        %1196 = vmatprep.subr.mxu0 0.0
        %1197 = vmatpush2.msra.mxu0 0.0
        %1198 = vmatprep.subr.mxu0 0.0
        %1199 = vmatpush2.msra.mxu0 0.0
        %1200 = vmatprep.subr.mxu0 0.0
        %1201 = vmatpush2.msra.mxu0 0.0
        %1202 = vmatprep.subr.mxu0 0.0
        %1203 = vmatpush2.msra.mxu0 0.0
        %1204 = vmatprep.subr.mxu0 0.0
        %1205 = vmatpush2.msra.mxu0 0.0
        %1206 = vmatprep.subr.mxu0 0.0
        %1207 = vmatpush2.msra.mxu0 0.0
        %1208 = vmatprep.subr.mxu0 0.0
        %1209 = vmatpush2.msra.mxu0 0.0
        %1210 = vmatprep.subr.mxu0 0.0
        %1211 = vmatpush2.msra.mxu0 0.0
        %1212 = vmatprep.subr.mxu0 0.0
        %1213 = vmatpush2.msra.mxu0 0.0
        %1214 = vmatprep.subr.mxu0 0.0
        %1215 = vmatpush2.msra.mxu0 0.0
        %1216 = vmatprep.subr.mxu0 0.0
        %1217 = vmatpush2.msra.mxu0 0.0
        %1218 = vmatprep.subr.mxu0 0.0
        %1219 = vmatpush2.msra.mxu0 0.0
        %1220 = vmatprep.subr.mxu0 0.0
        %1221 = vmatpush2.msra.mxu0 0.0
        %1222 = vmatprep.subr.mxu0 0.0
        %1223 = vmatpush2.msra.mxu0 0.0
        %1224 = vmatprep.mubr.f32.mxu0 0.0
        %1225 = vmatmul.mubr.f32.gmra.mxu0 %v528
        %v1226 = vpop.f32.mrf.mxu0
        %v1227 = vadd.f32 0.0, %v1226
        %v1228 = vpop.f32.mrf.mxu0
        %1229 = vdwg.mxu0
        %1230 = vmatprep.subr.mxu0 0.0
        %1231 = vmatpush1.msra.mxu0 0.0
        %1232 = vmatprep.subr.mxu0 0.0
        %1233 = vmatpush1.msra.mxu0 0.0
        %1234 = vmatprep.subr.mxu0 0.0
        %1235 = vmatpush1.msra.mxu0 0.0
        %1236 = vmatprep.subr.mxu0 0.0
        %1237 = vmatpush1.msra.mxu0 0.0
        %1238 = vmatprep.subr.mxu0 0.0
        %1239 = vmatpush1.msra.mxu0 0.0
        %1240 = vmatprep.subr.mxu0 0.0
        %1241 = vmatpush1.msra.mxu0 0.0
        %1242 = vmatprep.subr.mxu0 0.0
        %1243 = vmatpush1.msra.mxu0 0.0
        %1244 = vmatprep.subr.mxu0 0.0
        %1245 = vmatpush1.msra.mxu0 0.0
        %1246 = vmatprep.subr.mxu0 0.0
        %1247 = vmatpush1.msra.mxu0 0.0
        %1248 = vmatprep.subr.mxu0 0.0
        %1249 = vmatpush1.msra.mxu0 0.0
        %1250 = vmatprep.subr.mxu0 0.0
        %1251 = vmatpush1.msra.mxu0 0.0
        %1252 = vmatprep.subr.mxu0 0.0
        %1253 = vmatpush1.msra.mxu0 0.0
        %1254 = vmatprep.subr.mxu0 0.0
        %1255 = vmatpush1.msra.mxu0 %v522
        %1256 = vmatprep.subr.mxu0 0.0
        %1257 = vmatpush1.msra.mxu0 %v521
        %1258 = vmatprep.subr.mxu0 0.0
        %1259 = vmatpush1.msra.mxu0 %v520
        %1260 = vmatprep.subr.mxu0 0.0
        %1261 = vmatpush1.msra.mxu0 %v519
        %1262 = vmatprep.subr.mxu0 0.0
        %1263 = vmatpush2.msra.mxu0 0.0
        %1264 = vmatprep.subr.mxu0 0.0
        %1265 = vmatpush2.msra.mxu0 0.0
        %1266 = vmatprep.subr.mxu0 0.0
        %1267 = vmatpush2.msra.mxu0 0.0
        %1268 = vmatprep.subr.mxu0 0.0
        %1269 = vmatpush2.msra.mxu0 0.0
        %1270 = vmatprep.subr.mxu0 0.0
        %1271 = vmatpush2.msra.mxu0 0.0
        %1272 = vmatprep.subr.mxu0 0.0
        %1273 = vmatpush2.msra.mxu0 0.0
        %1274 = vmatprep.subr.mxu0 0.0
        %1275 = vmatpush2.msra.mxu0 0.0
        %1276 = vmatprep.subr.mxu0 0.0
        %1277 = vmatpush2.msra.mxu0 0.0
        %1278 = vmatprep.subr.mxu0 0.0
        %1279 = vmatpush2.msra.mxu0 0.0
        %1280 = vmatprep.subr.mxu0 0.0
        %1281 = vmatpush2.msra.mxu0 0.0
        %1282 = vmatprep.subr.mxu0 0.0
        %1283 = vmatpush2.msra.mxu0 0.0
        %1284 = vmatprep.subr.mxu0 0.0
        %1285 = vmatpush2.msra.mxu0 0.0
        %1286 = vmatprep.subr.mxu0 0.0
        %1287 = vmatpush2.msra.mxu0 0.0
        %1288 = vmatprep.subr.mxu0 0.0
        %1289 = vmatpush2.msra.mxu0 0.0
        %1290 = vmatprep.subr.mxu0 0.0
        %1291 = vmatpush2.msra.mxu0 0.0
        %1292 = vmatprep.subr.mxu0 0.0
        %1293 = vmatpush2.msra.mxu0 0.0
        %1294 = vmatprep.mubr.f32.mxu0 0.0
        %1295 = vmatmul.mubr.f32.gmra.mxu0 %v528
        %v1296 = vpop.f32.mrf.mxu0
        %v1297 = vadd.f32 0.0, %v1296
        %v1298 = vpop.f32.mrf.mxu0
        %1299 = vdwg.mxu0
        %1300 = vmatprep.subr.mxu0 0.0
        %1301 = vmatpush1.msra.mxu0 0.0
        %1302 = vmatprep.subr.mxu0 0.0
        %1303 = vmatpush1.msra.mxu0 0.0
        %1304 = vmatprep.subr.mxu0 0.0
        %1305 = vmatpush1.msra.mxu0 0.0
        %1306 = vmatprep.subr.mxu0 0.0
        %1307 = vmatpush1.msra.mxu0 0.0
        %1308 = vmatprep.subr.mxu0 0.0
        %1309 = vmatpush1.msra.mxu0 0.0
        %1310 = vmatprep.subr.mxu0 0.0
        %1311 = vmatpush1.msra.mxu0 0.0
        %1312 = vmatprep.subr.mxu0 0.0
        %1313 = vmatpush1.msra.mxu0 0.0
        %1314 = vmatprep.subr.mxu0 0.0
        %1315 = vmatpush1.msra.mxu0 0.0
        %1316 = vmatprep.subr.mxu0 0.0
        %1317 = vmatpush1.msra.mxu0 0.0
        %1318 = vmatprep.subr.mxu0 0.0
        %1319 = vmatpush1.msra.mxu0 0.0
        %1320 = vmatprep.subr.mxu0 0.0
        %1321 = vmatpush1.msra.mxu0 0.0
        %1322 = vmatprep.subr.mxu0 0.0
        %1323 = vmatpush1.msra.mxu0 0.0
        %1324 = vmatprep.subr.mxu0 0.0
        %1325 = vmatpush1.msra.mxu0 %v526
        %1326 = vmatprep.subr.mxu0 0.0
        %1327 = vmatpush1.msra.mxu0 %v525
        %1328 = vmatprep.subr.mxu0 0.0
        %1329 = vmatpush1.msra.mxu0 %v524
        %1330 = vmatprep.subr.mxu0 0.0
        %1331 = vmatpush1.msra.mxu0 %v523
        %1332 = vmatprep.subr.mxu0 0.0
        %1333 = vmatpush2.msra.mxu0 0.0
        %1334 = vmatprep.subr.mxu0 0.0
        %1335 = vmatpush2.msra.mxu0 0.0
        %1336 = vmatprep.subr.mxu0 0.0
        %1337 = vmatpush2.msra.mxu0 0.0
        %1338 = vmatprep.subr.mxu0 0.0
        %1339 = vmatpush2.msra.mxu0 0.0
        %1340 = vmatprep.subr.mxu0 0.0
        %1341 = vmatpush2.msra.mxu0 0.0
        %1342 = vmatprep.subr.mxu0 0.0
        %1343 = vmatpush2.msra.mxu0 0.0
        %1344 = vmatprep.subr.mxu0 0.0
        %1345 = vmatpush2.msra.mxu0 0.0
        %1346 = vmatprep.subr.mxu0 0.0
        %1347 = vmatpush2.msra.mxu0 0.0
        %1348 = vmatprep.subr.mxu0 0.0
        %1349 = vmatpush2.msra.mxu0 0.0
        %1350 = vmatprep.subr.mxu0 0.0
        %1351 = vmatpush2.msra.mxu0 0.0
        %1352 = vmatprep.subr.mxu0 0.0
        %1353 = vmatpush2.msra.mxu0 0.0
        %1354 = vmatprep.subr.mxu0 0.0
        %1355 = vmatpush2.msra.mxu0 0.0
        %1356 = vmatprep.subr.mxu0 0.0
        %1357 = vmatpush2.msra.mxu0 0.0
        %1358 = vmatprep.subr.mxu0 0.0
        %1359 = vmatpush2.msra.mxu0 0.0
        %1360 = vmatprep.subr.mxu0 0.0
        %1361 = vmatpush2.msra.mxu0 0.0
        %1362 = vmatprep.subr.mxu0 0.0
        %1363 = vmatpush2.msra.mxu0 0.0
        %1364 = vmatprep.mubr.f32.mxu0 0.0
        %1365 = vmatmul.mubr.f32.gmra.mxu0 %v528
        %v1366 = vpop.f32.mrf.mxu0
        %v1367 = vadd.f32 0.0, %v1366
        %v1368 = vpop.f32.mrf.mxu0
        %1369 = vdwg.mxu0
        %v1370 = vmul.f32 %v597, 0.35355338
        %v1371 = vmul.f32 %v667, 0.35355338
        %v1372 = vmul.f32 %v737, 0.35355338
        %v1373 = vmul.f32 %v807, 0.35355338
        %vm1374 = vcmask 64512
        %v1376 = vsel %vm1374, %v1370, 0
        %v1379 = vsel %vm1374, %v877, 0
        %1381 = vmatprep.subr.mxu0 0.0
        %1382 = vmatpush1.xpose.msra.mxu0 0.0
        %1383 = vmatprep.subr.mxu0 0.0
        %1384 = vmatpush1.xpose.msra.mxu0 0.0
        %1385 = vmatprep.subr.mxu0 0.0
        %1386 = vmatpush1.xpose.msra.mxu0 0.0
        %1387 = vmatprep.subr.mxu0 0.0
        %1388 = vmatpush1.xpose.msra.mxu0 0.0
        %1389 = vmatprep.subr.mxu0 0.0
        %1390 = vmatpush1.xpose.msra.mxu0 0.0
        %1391 = vmatprep.subr.mxu0 0.0
        %1392 = vmatpush1.xpose.msra.mxu0 0.0
        %1393 = vmatprep.subr.mxu0 0.0
        %1394 = vmatpush1.xpose.msra.mxu0 0.0
        %1395 = vmatprep.subr.mxu0 0.0
        %1396 = vmatpush1.xpose.msra.mxu0 0.0
        %1397 = vmatprep.subr.mxu0 0.0
        %1398 = vmatpush1.xpose.msra.mxu0 0.0
        %1399 = vmatprep.subr.mxu0 0.0
        %1400 = vmatpush1.xpose.msra.mxu0 0.0
        %1401 = vmatprep.subr.mxu0 0.0
        %1402 = vmatpush1.xpose.msra.mxu0 0.0
        %1403 = vmatprep.subr.mxu0 0.0
        %1404 = vmatpush1.xpose.msra.mxu0 0.0
        %1405 = vmatprep.subr.mxu0 0.0
        %1406 = vmatpush1.xpose.msra.mxu0 0.0
        %1407 = vmatprep.subr.mxu0 0.0
        %1408 = vmatpush1.xpose.msra.mxu0 0.0
        %1409 = vmatprep.subr.mxu0 0.0
        %1410 = vmatpush1.xpose.msra.mxu0 0.0
        %1411 = vmatprep.subr.mxu0 0.0
        %1412 = vmatpush1.xpose.msra.mxu0 %v1379
        %1413 = vmatprep.subr.mxu0 0.0
        %1414 = vmatpush2.xpose.msra.mxu0 0.0
        %1415 = vmatprep.subr.mxu0 0.0
        %1416 = vmatpush2.xpose.msra.mxu0 0.0
        %1417 = vmatprep.subr.mxu0 0.0
        %1418 = vmatpush2.xpose.msra.mxu0 0.0
        %1419 = vmatprep.subr.mxu0 0.0
        %1420 = vmatpush2.xpose.msra.mxu0 0.0
        %1421 = vmatprep.subr.mxu0 0.0
        %1422 = vmatpush2.xpose.msra.mxu0 0.0
        %1423 = vmatprep.subr.mxu0 0.0
        %1424 = vmatpush2.xpose.msra.mxu0 0.0
        %1425 = vmatprep.subr.mxu0 0.0
        %1426 = vmatpush2.xpose.msra.mxu0 0.0
        %1427 = vmatprep.subr.mxu0 0.0
        %1428 = vmatpush2.xpose.msra.mxu0 0.0
        %1429 = vmatprep.subr.mxu0 0.0
        %1430 = vmatpush2.xpose.msra.mxu0 0.0
        %1431 = vmatprep.subr.mxu0 0.0
        %1432 = vmatpush2.xpose.msra.mxu0 0.0
        %1433 = vmatprep.subr.mxu0 0.0
        %1434 = vmatpush2.xpose.msra.mxu0 0.0
        %1435 = vmatprep.subr.mxu0 0.0
        %1436 = vmatpush2.xpose.msra.mxu0 0.0
        %1437 = vmatprep.subr.mxu0 0.0
        %1438 = vmatpush2.xpose.msra.mxu0 0.0
        %1439 = vmatprep.subr.mxu0 0.0
        %1440 = vmatpush2.xpose.msra.mxu0 0.0
        %1441 = vmatprep.subr.mxu0 0.0
        %1442 = vmatpush2.xpose.msra.mxu0 0.0
        %1443 = vmatprep.subr.mxu0 0.0
        %1444 = vmatpush2.xpose.msra.mxu0 0.0
        %1445 = vmatprep.mubr.f32.mxu0 0.0
        %1446 = vmatmul.mubr.f32.gmra.mxu0 %v1376
        %v1447 = vpop.f32.mrf.mxu0
        %v1448 = vadd.f32 0.0, %v1447
        %v1449 = vpop.f32.mrf.mxu0
        %1450 = vdwg.mxu0
        %v1452 = vsel %vm1374, %v1371, 0
        %v1455 = vsel %vm1374, %v947, 0
        %1457 = vmatprep.subr.mxu0 0.0
        %1458 = vmatpush1.xpose.msra.mxu0 0.0
        %1459 = vmatprep.subr.mxu0 0.0
        %1460 = vmatpush1.xpose.msra.mxu0 0.0
        %1461 = vmatprep.subr.mxu0 0.0
        %1462 = vmatpush1.xpose.msra.mxu0 0.0
        %1463 = vmatprep.subr.mxu0 0.0
        %1464 = vmatpush1.xpose.msra.mxu0 0.0
        %1465 = vmatprep.subr.mxu0 0.0
        %1466 = vmatpush1.xpose.msra.mxu0 0.0
        %1467 = vmatprep.subr.mxu0 0.0
        %1468 = vmatpush1.xpose.msra.mxu0 0.0
        %1469 = vmatprep.subr.mxu0 0.0
        %1470 = vmatpush1.xpose.msra.mxu0 0.0
        %1471 = vmatprep.subr.mxu0 0.0
        %1472 = vmatpush1.xpose.msra.mxu0 0.0
        %1473 = vmatprep.subr.mxu0 0.0
        %1474 = vmatpush1.xpose.msra.mxu0 0.0
        %1475 = vmatprep.subr.mxu0 0.0
        %1476 = vmatpush1.xpose.msra.mxu0 0.0
        %1477 = vmatprep.subr.mxu0 0.0
        %1478 = vmatpush1.xpose.msra.mxu0 0.0
        %1479 = vmatprep.subr.mxu0 0.0
        %1480 = vmatpush1.xpose.msra.mxu0 0.0
        %1481 = vmatprep.subr.mxu0 0.0
        %1482 = vmatpush1.xpose.msra.mxu0 0.0
        %1483 = vmatprep.subr.mxu0 0.0
        %1484 = vmatpush1.xpose.msra.mxu0 0.0
        %1485 = vmatprep.subr.mxu0 0.0
        %1486 = vmatpush1.xpose.msra.mxu0 0.0
        %1487 = vmatprep.subr.mxu0 0.0
        %1488 = vmatpush1.xpose.msra.mxu0 %v1455
        %1489 = vmatprep.subr.mxu0 0.0
        %1490 = vmatpush2.xpose.msra.mxu0 0.0
        %1491 = vmatprep.subr.mxu0 0.0
        %1492 = vmatpush2.xpose.msra.mxu0 0.0
        %1493 = vmatprep.subr.mxu0 0.0
        %1494 = vmatpush2.xpose.msra.mxu0 0.0
        %1495 = vmatprep.subr.mxu0 0.0
        %1496 = vmatpush2.xpose.msra.mxu0 0.0
        %1497 = vmatprep.subr.mxu0 0.0
        %1498 = vmatpush2.xpose.msra.mxu0 0.0
        %1499 = vmatprep.subr.mxu0 0.0
        %1500 = vmatpush2.xpose.msra.mxu0 0.0
        %1501 = vmatprep.subr.mxu0 0.0
        %1502 = vmatpush2.xpose.msra.mxu0 0.0
        %1503 = vmatprep.subr.mxu0 0.0
        %1504 = vmatpush2.xpose.msra.mxu0 0.0
        %1505 = vmatprep.subr.mxu0 0.0
        %1506 = vmatpush2.xpose.msra.mxu0 0.0
        %1507 = vmatprep.subr.mxu0 0.0
        %1508 = vmatpush2.xpose.msra.mxu0 0.0
        %1509 = vmatprep.subr.mxu0 0.0
        %1510 = vmatpush2.xpose.msra.mxu0 0.0
        %1511 = vmatprep.subr.mxu0 0.0
        %1512 = vmatpush2.xpose.msra.mxu0 0.0
        %1513 = vmatprep.subr.mxu0 0.0
        %1514 = vmatpush2.xpose.msra.mxu0 0.0
        %1515 = vmatprep.subr.mxu0 0.0
        %1516 = vmatpush2.xpose.msra.mxu0 0.0
        %1517 = vmatprep.subr.mxu0 0.0
        %1518 = vmatpush2.xpose.msra.mxu0 0.0
        %1519 = vmatprep.subr.mxu0 0.0
        %1520 = vmatpush2.xpose.msra.mxu0 0.0
        %1521 = vmatprep.mubr.f32.mxu0 0.0
        %1522 = vmatmul.mubr.f32.gmra.mxu0 %v1452
        %v1523 = vpop.f32.mrf.mxu0
        %v1524 = vadd.f32 0.0, %v1523
        %v1525 = vpop.f32.mrf.mxu0
        %1526 = vdwg.mxu0
        %v1528 = vsel %vm1374, %v1372, 0
        %v1531 = vsel %vm1374, %v1017, 0
        %1533 = vmatprep.subr.mxu0 0.0
        %1534 = vmatpush1.xpose.msra.mxu0 0.0
        %1535 = vmatprep.subr.mxu0 0.0
        %1536 = vmatpush1.xpose.msra.mxu0 0.0
        %1537 = vmatprep.subr.mxu0 0.0
        %1538 = vmatpush1.xpose.msra.mxu0 0.0
        %1539 = vmatprep.subr.mxu0 0.0
        %1540 = vmatpush1.xpose.msra.mxu0 0.0
        %1541 = vmatprep.subr.mxu0 0.0
        %1542 = vmatpush1.xpose.msra.mxu0 0.0
        %1543 = vmatprep.subr.mxu0 0.0
        %1544 = vmatpush1.xpose.msra.mxu0 0.0
        %1545 = vmatprep.subr.mxu0 0.0
        %1546 = vmatpush1.xpose.msra.mxu0 0.0
        %1547 = vmatprep.subr.mxu0 0.0
        %1548 = vmatpush1.xpose.msra.mxu0 0.0
        %1549 = vmatprep.subr.mxu0 0.0
        %1550 = vmatpush1.xpose.msra.mxu0 0.0
        %1551 = vmatprep.subr.mxu0 0.0
        %1552 = vmatpush1.xpose.msra.mxu0 0.0
        %1553 = vmatprep.subr.mxu0 0.0
        %1554 = vmatpush1.xpose.msra.mxu0 0.0
        %1555 = vmatprep.subr.mxu0 0.0
        %1556 = vmatpush1.xpose.msra.mxu0 0.0
        %1557 = vmatprep.subr.mxu0 0.0
        %1558 = vmatpush1.xpose.msra.mxu0 0.0
        %1559 = vmatprep.subr.mxu0 0.0
        %1560 = vmatpush1.xpose.msra.mxu0 0.0
        %1561 = vmatprep.subr.mxu0 0.0
        %1562 = vmatpush1.xpose.msra.mxu0 0.0
        %1563 = vmatprep.subr.mxu0 0.0
        %1564 = vmatpush1.xpose.msra.mxu0 %v1531
        %1565 = vmatprep.subr.mxu0 0.0
        %1566 = vmatpush2.xpose.msra.mxu0 0.0
        %1567 = vmatprep.subr.mxu0 0.0
        %1568 = vmatpush2.xpose.msra.mxu0 0.0
        %1569 = vmatprep.subr.mxu0 0.0
        %1570 = vmatpush2.xpose.msra.mxu0 0.0
        %1571 = vmatprep.subr.mxu0 0.0
        %1572 = vmatpush2.xpose.msra.mxu0 0.0
        %1573 = vmatprep.subr.mxu0 0.0
        %1574 = vmatpush2.xpose.msra.mxu0 0.0
        %1575 = vmatprep.subr.mxu0 0.0
        %1576 = vmatpush2.xpose.msra.mxu0 0.0
        %1577 = vmatprep.subr.mxu0 0.0
        %1578 = vmatpush2.xpose.msra.mxu0 0.0
        %1579 = vmatprep.subr.mxu0 0.0
        %1580 = vmatpush2.xpose.msra.mxu0 0.0
        %1581 = vmatprep.subr.mxu0 0.0
        %1582 = vmatpush2.xpose.msra.mxu0 0.0
        %1583 = vmatprep.subr.mxu0 0.0
        %1584 = vmatpush2.xpose.msra.mxu0 0.0
        %1585 = vmatprep.subr.mxu0 0.0
        %1586 = vmatpush2.xpose.msra.mxu0 0.0
        %1587 = vmatprep.subr.mxu0 0.0
        %1588 = vmatpush2.xpose.msra.mxu0 0.0
        %1589 = vmatprep.subr.mxu0 0.0
        %1590 = vmatpush2.xpose.msra.mxu0 0.0
        %1591 = vmatprep.subr.mxu0 0.0
        %1592 = vmatpush2.xpose.msra.mxu0 0.0
        %1593 = vmatprep.subr.mxu0 0.0
        %1594 = vmatpush2.xpose.msra.mxu0 0.0
        %1595 = vmatprep.subr.mxu0 0.0
        %1596 = vmatpush2.xpose.msra.mxu0 0.0
        %1597 = vmatprep.mubr.f32.mxu0 0.0
        %1598 = vmatmul.mubr.f32.gmra.mxu0 %v1528
        %v1599 = vpop.f32.mrf.mxu0
        %v1600 = vadd.f32 0.0, %v1599
        %v1601 = vpop.f32.mrf.mxu0
        %1602 = vdwg.mxu0
        %v1604 = vsel %vm1374, %v1373, 0
        %v1607 = vsel %vm1374, %v1087, 0
        %1609 = vmatprep.subr.mxu0 0.0
        %1610 = vmatpush1.xpose.msra.mxu0 0.0
        %1611 = vmatprep.subr.mxu0 0.0
        %1612 = vmatpush1.xpose.msra.mxu0 0.0
        %1613 = vmatprep.subr.mxu0 0.0
        %1614 = vmatpush1.xpose.msra.mxu0 0.0
        %1615 = vmatprep.subr.mxu0 0.0
        %1616 = vmatpush1.xpose.msra.mxu0 0.0
        %1617 = vmatprep.subr.mxu0 0.0
        %1618 = vmatpush1.xpose.msra.mxu0 0.0
        %1619 = vmatprep.subr.mxu0 0.0
        %1620 = vmatpush1.xpose.msra.mxu0 0.0
        %1621 = vmatprep.subr.mxu0 0.0
        %1622 = vmatpush1.xpose.msra.mxu0 0.0
        %1623 = vmatprep.subr.mxu0 0.0
        %1624 = vmatpush1.xpose.msra.mxu0 0.0
        %1625 = vmatprep.subr.mxu0 0.0
        %1626 = vmatpush1.xpose.msra.mxu0 0.0
        %1627 = vmatprep.subr.mxu0 0.0
        %1628 = vmatpush1.xpose.msra.mxu0 0.0
        %1629 = vmatprep.subr.mxu0 0.0
        %1630 = vmatpush1.xpose.msra.mxu0 0.0
        %1631 = vmatprep.subr.mxu0 0.0
        %1632 = vmatpush1.xpose.msra.mxu0 0.0
        %1633 = vmatprep.subr.mxu0 0.0
        %1634 = vmatpush1.xpose.msra.mxu0 0.0
        %1635 = vmatprep.subr.mxu0 0.0
        %1636 = vmatpush1.xpose.msra.mxu0 0.0
        %1637 = vmatprep.subr.mxu0 0.0
        %1638 = vmatpush1.xpose.msra.mxu0 0.0
        %1639 = vmatprep.subr.mxu0 0.0
        %1640 = vmatpush1.xpose.msra.mxu0 %v1607
        %1641 = vmatprep.subr.mxu0 0.0
        %1642 = vmatpush2.xpose.msra.mxu0 0.0
        %1643 = vmatprep.subr.mxu0 0.0
        %1644 = vmatpush2.xpose.msra.mxu0 0.0
        %1645 = vmatprep.subr.mxu0 0.0
        %1646 = vmatpush2.xpose.msra.mxu0 0.0
        %1647 = vmatprep.subr.mxu0 0.0
        %1648 = vmatpush2.xpose.msra.mxu0 0.0
        %1649 = vmatprep.subr.mxu0 0.0
        %1650 = vmatpush2.xpose.msra.mxu0 0.0
        %1651 = vmatprep.subr.mxu0 0.0
        %1652 = vmatpush2.xpose.msra.mxu0 0.0
        %1653 = vmatprep.subr.mxu0 0.0
        %1654 = vmatpush2.xpose.msra.mxu0 0.0
        %1655 = vmatprep.subr.mxu0 0.0
        %1656 = vmatpush2.xpose.msra.mxu0 0.0
        %1657 = vmatprep.subr.mxu0 0.0
        %1658 = vmatpush2.xpose.msra.mxu0 0.0
        %1659 = vmatprep.subr.mxu0 0.0
        %1660 = vmatpush2.xpose.msra.mxu0 0.0
        %1661 = vmatprep.subr.mxu0 0.0
        %1662 = vmatpush2.xpose.msra.mxu0 0.0
        %1663 = vmatprep.subr.mxu0 0.0
        %1664 = vmatpush2.xpose.msra.mxu0 0.0
        %1665 = vmatprep.subr.mxu0 0.0
        %1666 = vmatpush2.xpose.msra.mxu0 0.0
        %1667 = vmatprep.subr.mxu0 0.0
        %1668 = vmatpush2.xpose.msra.mxu0 0.0
        %1669 = vmatprep.subr.mxu0 0.0
        %1670 = vmatpush2.xpose.msra.mxu0 0.0
        %1671 = vmatprep.subr.mxu0 0.0
        %1672 = vmatpush2.xpose.msra.mxu0 0.0
        %1673 = vmatprep.mubr.f32.mxu0 0.0
        %1674 = vmatmul.mubr.f32.gmra.mxu0 %v1604
        %v1675 = vpop.f32.mrf.mxu0
        %v1676 = vadd.f32 0.0, %v1675
        %v1677 = vpop.f32.mrf.mxu0
        %1678 = vdwg.mxu0
        %v1679 = vsel %vm1374, %v1448, -inf
        %1680 = vmax.xlane.f32.xlu0 %v1679
        %v1681 = vpop.xlane.xlu0 %1680
        %v1682 = vsel %vm1374, %v1524, -inf
        %1683 = vmax.xlane.f32.xlu0 %v1682
        %v1684 = vpop.xlane.xlu0 %1683
        %v1685 = vsel %vm1374, %v1600, -inf
        %1686 = vmax.xlane.f32.xlu0 %v1685
        %v1687 = vpop.xlane.xlu0 %1686
        %v1688 = vsel %vm1374, %v1676, -inf
        %1689 = vmax.xlane.f32.xlu0 %v1688
        %v1690 = vpop.xlane.xlu0 %1689
        %v1691 = vsub.f32 %v1448, %v1681
        %v1692 = vsub.f32 %v1524, %v1684
        %v1693 = vsub.f32 %v1600, %v1687
        %v1694 = vsub.f32 %v1676, %v1690
        %v1695 = vmul.f32 %v1691, 1.442695
        %v1696 = vpow.pop %v1695
        %v1697 = vmul.f32 %v1692, 1.442695
        %v1698 = vpow.pop %v1697
        %v1699 = vmul.f32 %v1693, 1.442695
        %v1700 = vpow.pop %v1699
        %v1701 = vmul.f32 %v1694, 1.442695
        %v1702 = vpow.pop %v1701
        %v1703 = vsel %vm1374, %v1696, 0.0
        %1704 = vadd.xlane.f32.xlu0 %v1703
        %v1705 = vpop.xlane.xlu0 %1704
        %v1706 = vsel %vm1374, %v1698, 0.0
        %1707 = vadd.xlane.f32.xlu0 %v1706
        %v1708 = vpop.xlane.xlu0 %1707
        %v1709 = vsel %vm1374, %v1700, 0.0
        %1710 = vadd.xlane.f32.xlu0 %v1709
        %v1711 = vpop.xlane.xlu0 %1710
        %v1712 = vsel %vm1374, %v1702, 0.0
        %1713 = vadd.xlane.f32.xlu0 %v1712
        %v1714 = vpop.xlane.xlu0 %1713
        %v1715 = vrcp.pop %v1705
        %v1716 = vrcp.pop %v1708
        %v1717 = vrcp.pop %v1711
        %v1718 = vrcp.pop %v1714
        %v1719 = vmul.f32 %v1696, %v1715
        %v1720 = vmul.f32 %v1698, %v1716
        %v1721 = vmul.f32 %v1700, %v1717
        %v1722 = vmul.f32 %v1702, %v1718
        %1723 = vst.msk [vmem:[%s442] sm:$0xff] %vm1374, %v1719
        %1724 = vst.msk [vmem:[%s442 + $0x8] sm:$0xff] %vm1374, %v1720
        %1725 = vst.msk [vmem:[%s442 + $0x10] sm:$0xff] %vm1374, %v1721
        %1726 = vst.msk [vmem:[%s442 + $0x18] sm:$0xff] %vm1374, %v1722
        %v1728 = vsel %vm1374, %v1719, 0
        %1730 = vmatprep.subr.mxu0 0.0
        %1731 = vmatpush1.msra.mxu0 0.0
        %1732 = vmatprep.subr.mxu0 0.0
        %1733 = vmatpush1.msra.mxu0 0.0
        %1734 = vmatprep.subr.mxu0 0.0
        %1735 = vmatpush1.msra.mxu0 0.0
        %1736 = vmatprep.subr.mxu0 0.0
        %1737 = vmatpush1.msra.mxu0 0.0
        %1738 = vmatprep.subr.mxu0 0.0
        %1739 = vmatpush1.msra.mxu0 0.0
        %1740 = vmatprep.subr.mxu0 0.0
        %1741 = vmatpush1.msra.mxu0 0.0
        %1742 = vmatprep.subr.mxu0 0.0
        %1743 = vmatpush1.msra.mxu0 0.0
        %1744 = vmatprep.subr.mxu0 0.0
        %1745 = vmatpush1.msra.mxu0 0.0
        %1746 = vmatprep.subr.mxu0 0.0
        %1747 = vmatpush1.msra.mxu0 0.0
        %1748 = vmatprep.subr.mxu0 0.0
        %1749 = vmatpush1.msra.mxu0 0.0
        %1750 = vmatprep.subr.mxu0 0.0
        %1751 = vmatpush1.msra.mxu0 0.0
        %1752 = vmatprep.subr.mxu0 0.0
        %1753 = vmatpush1.msra.mxu0 0.0
        %1754 = vmatprep.subr.mxu0 0.0
        %1755 = vmatpush1.msra.mxu0 0.0
        %1756 = vmatprep.subr.mxu0 0.0
        %1757 = vmatpush1.msra.mxu0 0.0
        %1758 = vmatprep.subr.mxu0 0.0
        %1759 = vmatpush1.msra.mxu0 0.0
        %1760 = vmatprep.subr.mxu0 0.0
        %1761 = vmatpush1.msra.mxu0 %v1157
        %1762 = vmatprep.subr.mxu0 0.0
        %1763 = vmatpush2.msra.mxu0 0.0
        %1764 = vmatprep.subr.mxu0 0.0
        %1765 = vmatpush2.msra.mxu0 0.0
        %1766 = vmatprep.subr.mxu0 0.0
        %1767 = vmatpush2.msra.mxu0 0.0
        %1768 = vmatprep.subr.mxu0 0.0
        %1769 = vmatpush2.msra.mxu0 0.0
        %1770 = vmatprep.subr.mxu0 0.0
        %1771 = vmatpush2.msra.mxu0 0.0
        %1772 = vmatprep.subr.mxu0 0.0
        %1773 = vmatpush2.msra.mxu0 0.0
        %1774 = vmatprep.subr.mxu0 0.0
        %1775 = vmatpush2.msra.mxu0 0.0
        %1776 = vmatprep.subr.mxu0 0.0
        %1777 = vmatpush2.msra.mxu0 0.0
        %1778 = vmatprep.subr.mxu0 0.0
        %1779 = vmatpush2.msra.mxu0 0.0
        %1780 = vmatprep.subr.mxu0 0.0
        %1781 = vmatpush2.msra.mxu0 0.0
        %1782 = vmatprep.subr.mxu0 0.0
        %1783 = vmatpush2.msra.mxu0 0.0
        %1784 = vmatprep.subr.mxu0 0.0
        %1785 = vmatpush2.msra.mxu0 0.0
        %1786 = vmatprep.subr.mxu0 0.0
        %1787 = vmatpush2.msra.mxu0 0.0
        %1788 = vmatprep.subr.mxu0 0.0
        %1789 = vmatpush2.msra.mxu0 0.0
        %1790 = vmatprep.subr.mxu0 0.0
        %1791 = vmatpush2.msra.mxu0 0.0
        %1792 = vmatprep.subr.mxu0 0.0
        %1793 = vmatpush2.msra.mxu0 0.0
        %1794 = vmatprep.mubr.f32.mxu0 0.0
        %1795 = vmatmul.mubr.f32.gmra.mxu0 %v1728
        %v1796 = vpop.f32.mrf.mxu0
        %v1797 = vadd.f32 0.0, %v1796
        %v1798 = vpop.f32.mrf.mxu0
        %1799 = vdwg.mxu0
        %v1801 = vsel %vm1374, %v1720, 0
        %1803 = vmatprep.subr.mxu0 0.0
        %1804 = vmatpush1.msra.mxu0 0.0
        %1805 = vmatprep.subr.mxu0 0.0
        %1806 = vmatpush1.msra.mxu0 0.0
        %1807 = vmatprep.subr.mxu0 0.0
        %1808 = vmatpush1.msra.mxu0 0.0
        %1809 = vmatprep.subr.mxu0 0.0
        %1810 = vmatpush1.msra.mxu0 0.0
        %1811 = vmatprep.subr.mxu0 0.0
        %1812 = vmatpush1.msra.mxu0 0.0
        %1813 = vmatprep.subr.mxu0 0.0
        %1814 = vmatpush1.msra.mxu0 0.0
        %1815 = vmatprep.subr.mxu0 0.0
        %1816 = vmatpush1.msra.mxu0 0.0
        %1817 = vmatprep.subr.mxu0 0.0
        %1818 = vmatpush1.msra.mxu0 0.0
        %1819 = vmatprep.subr.mxu0 0.0
        %1820 = vmatpush1.msra.mxu0 0.0
        %1821 = vmatprep.subr.mxu0 0.0
        %1822 = vmatpush1.msra.mxu0 0.0
        %1823 = vmatprep.subr.mxu0 0.0
        %1824 = vmatpush1.msra.mxu0 0.0
        %1825 = vmatprep.subr.mxu0 0.0
        %1826 = vmatpush1.msra.mxu0 0.0
        %1827 = vmatprep.subr.mxu0 0.0
        %1828 = vmatpush1.msra.mxu0 0.0
        %1829 = vmatprep.subr.mxu0 0.0
        %1830 = vmatpush1.msra.mxu0 0.0
        %1831 = vmatprep.subr.mxu0 0.0
        %1832 = vmatpush1.msra.mxu0 0.0
        %1833 = vmatprep.subr.mxu0 0.0
        %1834 = vmatpush1.msra.mxu0 %v1227
        %1835 = vmatprep.subr.mxu0 0.0
        %1836 = vmatpush2.msra.mxu0 0.0
        %1837 = vmatprep.subr.mxu0 0.0
        %1838 = vmatpush2.msra.mxu0 0.0
        %1839 = vmatprep.subr.mxu0 0.0
        %1840 = vmatpush2.msra.mxu0 0.0
        %1841 = vmatprep.subr.mxu0 0.0
        %1842 = vmatpush2.msra.mxu0 0.0
        %1843 = vmatprep.subr.mxu0 0.0
        %1844 = vmatpush2.msra.mxu0 0.0
        %1845 = vmatprep.subr.mxu0 0.0
        %1846 = vmatpush2.msra.mxu0 0.0
        %1847 = vmatprep.subr.mxu0 0.0
        %1848 = vmatpush2.msra.mxu0 0.0
        %1849 = vmatprep.subr.mxu0 0.0
        %1850 = vmatpush2.msra.mxu0 0.0
        %1851 = vmatprep.subr.mxu0 0.0
        %1852 = vmatpush2.msra.mxu0 0.0
        %1853 = vmatprep.subr.mxu0 0.0
        %1854 = vmatpush2.msra.mxu0 0.0
        %1855 = vmatprep.subr.mxu0 0.0
        %1856 = vmatpush2.msra.mxu0 0.0
        %1857 = vmatprep.subr.mxu0 0.0
        %1858 = vmatpush2.msra.mxu0 0.0
        %1859 = vmatprep.subr.mxu0 0.0
        %1860 = vmatpush2.msra.mxu0 0.0
        %1861 = vmatprep.subr.mxu0 0.0
        %1862 = vmatpush2.msra.mxu0 0.0
        %1863 = vmatprep.subr.mxu0 0.0
        %1864 = vmatpush2.msra.mxu0 0.0
        %1865 = vmatprep.subr.mxu0 0.0
        %1866 = vmatpush2.msra.mxu0 0.0
        %1867 = vmatprep.mubr.f32.mxu0 0.0
        %1868 = vmatmul.mubr.f32.gmra.mxu0 %v1801
        %v1869 = vpop.f32.mrf.mxu0
        %v1870 = vadd.f32 0.0, %v1869
        %v1871 = vpop.f32.mrf.mxu0
        %1872 = vdwg.mxu0
        %v1874 = vsel %vm1374, %v1721, 0
        %1876 = vmatprep.subr.mxu0 0.0
        %1877 = vmatpush1.msra.mxu0 0.0
        %1878 = vmatprep.subr.mxu0 0.0
        %1879 = vmatpush1.msra.mxu0 0.0
        %1880 = vmatprep.subr.mxu0 0.0
        %1881 = vmatpush1.msra.mxu0 0.0
        %1882 = vmatprep.subr.mxu0 0.0
        %1883 = vmatpush1.msra.mxu0 0.0
        %1884 = vmatprep.subr.mxu0 0.0
        %1885 = vmatpush1.msra.mxu0 0.0
        %1886 = vmatprep.subr.mxu0 0.0
        %1887 = vmatpush1.msra.mxu0 0.0
        %1888 = vmatprep.subr.mxu0 0.0
        %1889 = vmatpush1.msra.mxu0 0.0
        %1890 = vmatprep.subr.mxu0 0.0
        %1891 = vmatpush1.msra.mxu0 0.0
        %1892 = vmatprep.subr.mxu0 0.0
        %1893 = vmatpush1.msra.mxu0 0.0
        %1894 = vmatprep.subr.mxu0 0.0
        %1895 = vmatpush1.msra.mxu0 0.0
        %1896 = vmatprep.subr.mxu0 0.0
        %1897 = vmatpush1.msra.mxu0 0.0
        %1898 = vmatprep.subr.mxu0 0.0
        %1899 = vmatpush1.msra.mxu0 0.0
        %1900 = vmatprep.subr.mxu0 0.0
        %1901 = vmatpush1.msra.mxu0 0.0
        %1902 = vmatprep.subr.mxu0 0.0
        %1903 = vmatpush1.msra.mxu0 0.0
        %1904 = vmatprep.subr.mxu0 0.0
        %1905 = vmatpush1.msra.mxu0 0.0
        %1906 = vmatprep.subr.mxu0 0.0
        %1907 = vmatpush1.msra.mxu0 %v1297
        %1908 = vmatprep.subr.mxu0 0.0
        %1909 = vmatpush2.msra.mxu0 0.0
        %1910 = vmatprep.subr.mxu0 0.0
        %1911 = vmatpush2.msra.mxu0 0.0
        %1912 = vmatprep.subr.mxu0 0.0
        %1913 = vmatpush2.msra.mxu0 0.0
        %1914 = vmatprep.subr.mxu0 0.0
        %1915 = vmatpush2.msra.mxu0 0.0
        %1916 = vmatprep.subr.mxu0 0.0
        %1917 = vmatpush2.msra.mxu0 0.0
        %1918 = vmatprep.subr.mxu0 0.0
        %1919 = vmatpush2.msra.mxu0 0.0
        %1920 = vmatprep.subr.mxu0 0.0
        %1921 = vmatpush2.msra.mxu0 0.0
        %1922 = vmatprep.subr.mxu0 0.0
        %1923 = vmatpush2.msra.mxu0 0.0
        %1924 = vmatprep.subr.mxu0 0.0
        %1925 = vmatpush2.msra.mxu0 0.0
        %1926 = vmatprep.subr.mxu0 0.0
        %1927 = vmatpush2.msra.mxu0 0.0
        %1928 = vmatprep.subr.mxu0 0.0
        %1929 = vmatpush2.msra.mxu0 0.0
        %1930 = vmatprep.subr.mxu0 0.0
        %1931 = vmatpush2.msra.mxu0 0.0
        %1932 = vmatprep.subr.mxu0 0.0
        %1933 = vmatpush2.msra.mxu0 0.0
        %1934 = vmatprep.subr.mxu0 0.0
        %1935 = vmatpush2.msra.mxu0 0.0
        %1936 = vmatprep.subr.mxu0 0.0
        %1937 = vmatpush2.msra.mxu0 0.0
        %1938 = vmatprep.subr.mxu0 0.0
        %1939 = vmatpush2.msra.mxu0 0.0
        %1940 = vmatprep.mubr.f32.mxu0 0.0
        %1941 = vmatmul.mubr.f32.gmra.mxu0 %v1874
        %v1942 = vpop.f32.mrf.mxu0
        %v1943 = vadd.f32 0.0, %v1942
        %v1944 = vpop.f32.mrf.mxu0
        %1945 = vdwg.mxu0
        %v1947 = vsel %vm1374, %v1722, 0
        %1949 = vmatprep.subr.mxu0 0.0
        %1950 = vmatpush1.msra.mxu0 0.0
        %1951 = vmatprep.subr.mxu0 0.0
        %1952 = vmatpush1.msra.mxu0 0.0
        %1953 = vmatprep.subr.mxu0 0.0
        %1954 = vmatpush1.msra.mxu0 0.0
        %1955 = vmatprep.subr.mxu0 0.0
        %1956 = vmatpush1.msra.mxu0 0.0
        %1957 = vmatprep.subr.mxu0 0.0
        %1958 = vmatpush1.msra.mxu0 0.0
        %1959 = vmatprep.subr.mxu0 0.0
        %1960 = vmatpush1.msra.mxu0 0.0
        %1961 = vmatprep.subr.mxu0 0.0
        %1962 = vmatpush1.msra.mxu0 0.0
        %1963 = vmatprep.subr.mxu0 0.0
        %1964 = vmatpush1.msra.mxu0 0.0
        %1965 = vmatprep.subr.mxu0 0.0
        %1966 = vmatpush1.msra.mxu0 0.0
        %1967 = vmatprep.subr.mxu0 0.0
        %1968 = vmatpush1.msra.mxu0 0.0
        %1969 = vmatprep.subr.mxu0 0.0
        %1970 = vmatpush1.msra.mxu0 0.0
        %1971 = vmatprep.subr.mxu0 0.0
        %1972 = vmatpush1.msra.mxu0 0.0
        %1973 = vmatprep.subr.mxu0 0.0
        %1974 = vmatpush1.msra.mxu0 0.0
        %1975 = vmatprep.subr.mxu0 0.0
        %1976 = vmatpush1.msra.mxu0 0.0
        %1977 = vmatprep.subr.mxu0 0.0
        %1978 = vmatpush1.msra.mxu0 0.0
        %1979 = vmatprep.subr.mxu0 0.0
        %1980 = vmatpush1.msra.mxu0 %v1367
        %1981 = vmatprep.subr.mxu0 0.0
        %1982 = vmatpush2.msra.mxu0 0.0
        %1983 = vmatprep.subr.mxu0 0.0
        %1984 = vmatpush2.msra.mxu0 0.0
        %1985 = vmatprep.subr.mxu0 0.0
        %1986 = vmatpush2.msra.mxu0 0.0
        %1987 = vmatprep.subr.mxu0 0.0
        %1988 = vmatpush2.msra.mxu0 0.0
        %1989 = vmatprep.subr.mxu0 0.0
        %1990 = vmatpush2.msra.mxu0 0.0
        %1991 = vmatprep.subr.mxu0 0.0
        %1992 = vmatpush2.msra.mxu0 0.0
        %1993 = vmatprep.subr.mxu0 0.0
        %1994 = vmatpush2.msra.mxu0 0.0
        %1995 = vmatprep.subr.mxu0 0.0
        %1996 = vmatpush2.msra.mxu0 0.0
        %1997 = vmatprep.subr.mxu0 0.0
        %1998 = vmatpush2.msra.mxu0 0.0
        %1999 = vmatprep.subr.mxu0 0.0
        %2000 = vmatpush2.msra.mxu0 0.0
        %2001 = vmatprep.subr.mxu0 0.0
        %2002 = vmatpush2.msra.mxu0 0.0
        %2003 = vmatprep.subr.mxu0 0.0
        %2004 = vmatpush2.msra.mxu0 0.0
        %2005 = vmatprep.subr.mxu0 0.0
        %2006 = vmatpush2.msra.mxu0 0.0
        %2007 = vmatprep.subr.mxu0 0.0
        %2008 = vmatpush2.msra.mxu0 0.0
        %2009 = vmatprep.subr.mxu0 0.0
        %2010 = vmatpush2.msra.mxu0 0.0
        %2011 = vmatprep.subr.mxu0 0.0
        %2012 = vmatpush2.msra.mxu0 0.0
        %2013 = vmatprep.mubr.f32.mxu0 0.0
        %2014 = vmatmul.mubr.f32.gmra.mxu0 %v1947
        %v2015 = vpop.f32.mrf.mxu0
        %v2016 = vadd.f32 0.0, %v2015
        %v2017 = vpop.f32.mrf.mxu0
        %2018 = vdwg.mxu0
        %v2019 = vld [vmem:[%s4] sm:$0xff]
        %v2020 = vld [vmem:[%s4 + $0x8] sm:$0xff]
        %v2021 = vld [vmem:[%s4 + $0x10] sm:$0xff]
        %v2022 = vld [vmem:[%s4 + $0x18] sm:$0xff]
        %v2024 = vsel %vm1374, %v1797, 0
        %2026 = vmatprep.subr.mxu0 0.0
        %2027 = vmatpush1.msra.mxu0 0.0
        %2028 = vmatprep.subr.mxu0 0.0
        %2029 = vmatpush1.msra.mxu0 0.0
        %2030 = vmatprep.subr.mxu0 0.0
        %2031 = vmatpush1.msra.mxu0 0.0
        %2032 = vmatprep.subr.mxu0 0.0
        %2033 = vmatpush1.msra.mxu0 0.0
        %2034 = vmatprep.subr.mxu0 0.0
        %2035 = vmatpush1.msra.mxu0 0.0
        %2036 = vmatprep.subr.mxu0 0.0
        %2037 = vmatpush1.msra.mxu0 0.0
        %2038 = vmatprep.subr.mxu0 0.0
        %2039 = vmatpush1.msra.mxu0 0.0
        %2040 = vmatprep.subr.mxu0 0.0
        %2041 = vmatpush1.msra.mxu0 0.0
        %2042 = vmatprep.subr.mxu0 0.0
        %2043 = vmatpush1.msra.mxu0 0.0
        %2044 = vmatprep.subr.mxu0 0.0
        %2045 = vmatpush1.msra.mxu0 0.0
        %2046 = vmatprep.subr.mxu0 0.0
        %2047 = vmatpush1.msra.mxu0 0.0
        %2048 = vmatprep.subr.mxu0 0.0
        %2049 = vmatpush1.msra.mxu0 0.0
        %2050 = vmatprep.subr.mxu0 0.0
        %2051 = vmatpush1.msra.mxu0 0.0
        %2052 = vmatprep.subr.mxu0 0.0
        %2053 = vmatpush1.msra.mxu0 0.0
        %2054 = vmatprep.subr.mxu0 0.0
        %2055 = vmatpush1.msra.mxu0 0.0
        %2056 = vmatprep.subr.mxu0 0.0
        %2057 = vmatpush1.msra.mxu0 %v2019
        %2058 = vmatprep.subr.mxu0 0.0
        %2059 = vmatpush2.msra.mxu0 0.0
        %2060 = vmatprep.subr.mxu0 0.0
        %2061 = vmatpush2.msra.mxu0 0.0
        %2062 = vmatprep.subr.mxu0 0.0
        %2063 = vmatpush2.msra.mxu0 0.0
        %2064 = vmatprep.subr.mxu0 0.0
        %2065 = vmatpush2.msra.mxu0 0.0
        %2066 = vmatprep.subr.mxu0 0.0
        %2067 = vmatpush2.msra.mxu0 0.0
        %2068 = vmatprep.subr.mxu0 0.0
        %2069 = vmatpush2.msra.mxu0 0.0
        %2070 = vmatprep.subr.mxu0 0.0
        %2071 = vmatpush2.msra.mxu0 0.0
        %2072 = vmatprep.subr.mxu0 0.0
        %2073 = vmatpush2.msra.mxu0 0.0
        %2074 = vmatprep.subr.mxu0 0.0
        %2075 = vmatpush2.msra.mxu0 0.0
        %2076 = vmatprep.subr.mxu0 0.0
        %2077 = vmatpush2.msra.mxu0 0.0
        %2078 = vmatprep.subr.mxu0 0.0
        %2079 = vmatpush2.msra.mxu0 0.0
        %2080 = vmatprep.subr.mxu0 0.0
        %2081 = vmatpush2.msra.mxu0 0.0
        %2082 = vmatprep.subr.mxu0 0.0
        %2083 = vmatpush2.msra.mxu0 0.0
        %2084 = vmatprep.subr.mxu0 0.0
        %2085 = vmatpush2.msra.mxu0 0.0
        %2086 = vmatprep.subr.mxu0 0.0
        %2087 = vmatpush2.msra.mxu0 0.0
        %2088 = vmatprep.subr.mxu0 0.0
        %2089 = vmatpush2.msra.mxu0 0.0
        %2090 = vmatprep.mubr.f32.mxu0 0.0
        %2091 = vmatmul.mubr.f32.gmra.mxu0 %v2024
        %v2092 = vpop.f32.mrf.mxu0
        %v2093 = vadd.f32 0.0, %v2092
        %v2094 = vpop.f32.mrf.mxu0
        %2095 = vdwg.mxu0
        %v2097 = vsel %vm1374, %v1870, 0
        %2099 = vmatprep.subr.mxu0 0.0
        %2100 = vmatpush1.msra.mxu0 0.0
        %2101 = vmatprep.subr.mxu0 0.0
        %2102 = vmatpush1.msra.mxu0 0.0
        %2103 = vmatprep.subr.mxu0 0.0
        %2104 = vmatpush1.msra.mxu0 0.0
        %2105 = vmatprep.subr.mxu0 0.0
        %2106 = vmatpush1.msra.mxu0 0.0
        %2107 = vmatprep.subr.mxu0 0.0
        %2108 = vmatpush1.msra.mxu0 0.0
        %2109 = vmatprep.subr.mxu0 0.0
        %2110 = vmatpush1.msra.mxu0 0.0
        %2111 = vmatprep.subr.mxu0 0.0
        %2112 = vmatpush1.msra.mxu0 0.0
        %2113 = vmatprep.subr.mxu0 0.0
        %2114 = vmatpush1.msra.mxu0 0.0
        %2115 = vmatprep.subr.mxu0 0.0
        %2116 = vmatpush1.msra.mxu0 0.0
        %2117 = vmatprep.subr.mxu0 0.0
        %2118 = vmatpush1.msra.mxu0 0.0
        %2119 = vmatprep.subr.mxu0 0.0
        %2120 = vmatpush1.msra.mxu0 0.0
        %2121 = vmatprep.subr.mxu0 0.0
        %2122 = vmatpush1.msra.mxu0 0.0
        %2123 = vmatprep.subr.mxu0 0.0
        %2124 = vmatpush1.msra.mxu0 0.0
        %2125 = vmatprep.subr.mxu0 0.0
        %2126 = vmatpush1.msra.mxu0 0.0
        %2127 = vmatprep.subr.mxu0 0.0
        %2128 = vmatpush1.msra.mxu0 0.0
        %2129 = vmatprep.subr.mxu0 0.0
        %2130 = vmatpush1.msra.mxu0 %v2020
        %2131 = vmatprep.subr.mxu0 0.0
        %2132 = vmatpush2.msra.mxu0 0.0
        %2133 = vmatprep.subr.mxu0 0.0
        %2134 = vmatpush2.msra.mxu0 0.0
        %2135 = vmatprep.subr.mxu0 0.0
        %2136 = vmatpush2.msra.mxu0 0.0
        %2137 = vmatprep.subr.mxu0 0.0
        %2138 = vmatpush2.msra.mxu0 0.0
        %2139 = vmatprep.subr.mxu0 0.0
        %2140 = vmatpush2.msra.mxu0 0.0
        %2141 = vmatprep.subr.mxu0 0.0
        %2142 = vmatpush2.msra.mxu0 0.0
        %2143 = vmatprep.subr.mxu0 0.0
        %2144 = vmatpush2.msra.mxu0 0.0
        %2145 = vmatprep.subr.mxu0 0.0
        %2146 = vmatpush2.msra.mxu0 0.0
        %2147 = vmatprep.subr.mxu0 0.0
        %2148 = vmatpush2.msra.mxu0 0.0
        %2149 = vmatprep.subr.mxu0 0.0
        %2150 = vmatpush2.msra.mxu0 0.0
        %2151 = vmatprep.subr.mxu0 0.0
        %2152 = vmatpush2.msra.mxu0 0.0
        %2153 = vmatprep.subr.mxu0 0.0
        %2154 = vmatpush2.msra.mxu0 0.0
        %2155 = vmatprep.subr.mxu0 0.0
        %2156 = vmatpush2.msra.mxu0 0.0
        %2157 = vmatprep.subr.mxu0 0.0
        %2158 = vmatpush2.msra.mxu0 0.0
        %2159 = vmatprep.subr.mxu0 0.0
        %2160 = vmatpush2.msra.mxu0 0.0
        %2161 = vmatprep.subr.mxu0 0.0
        %2162 = vmatpush2.msra.mxu0 0.0
        %2163 = vmatprep.mubr.f32.mxu0 0.0
        %2164 = vmatmul.mubr.f32.gmra.mxu0 %v2097
        %v2165 = vpop.f32.mrf.mxu0
        %v2166 = vadd.f32 0.0, %v2165
        %v2167 = vpop.f32.mrf.mxu0
        %2168 = vdwg.mxu0
        %v2170 = vsel %vm1374, %v1943, 0
        %2172 = vmatprep.subr.mxu0 0.0
        %2173 = vmatpush1.msra.mxu0 0.0
        %2174 = vmatprep.subr.mxu0 0.0
        %2175 = vmatpush1.msra.mxu0 0.0
        %2176 = vmatprep.subr.mxu0 0.0
        %2177 = vmatpush1.msra.mxu0 0.0
        %2178 = vmatprep.subr.mxu0 0.0
        %2179 = vmatpush1.msra.mxu0 0.0
        %2180 = vmatprep.subr.mxu0 0.0
        %2181 = vmatpush1.msra.mxu0 0.0
        %2182 = vmatprep.subr.mxu0 0.0
        %2183 = vmatpush1.msra.mxu0 0.0
        %2184 = vmatprep.subr.mxu0 0.0
        %2185 = vmatpush1.msra.mxu0 0.0
        %2186 = vmatprep.subr.mxu0 0.0
        %2187 = vmatpush1.msra.mxu0 0.0
        %2188 = vmatprep.subr.mxu0 0.0
        %2189 = vmatpush1.msra.mxu0 0.0
        %2190 = vmatprep.subr.mxu0 0.0
        %2191 = vmatpush1.msra.mxu0 0.0
        %2192 = vmatprep.subr.mxu0 0.0
        %2193 = vmatpush1.msra.mxu0 0.0
        %2194 = vmatprep.subr.mxu0 0.0
        %2195 = vmatpush1.msra.mxu0 0.0
        %2196 = vmatprep.subr.mxu0 0.0
        %2197 = vmatpush1.msra.mxu0 0.0
        %2198 = vmatprep.subr.mxu0 0.0
        %2199 = vmatpush1.msra.mxu0 0.0
        %2200 = vmatprep.subr.mxu0 0.0
        %2201 = vmatpush1.msra.mxu0 0.0
        %2202 = vmatprep.subr.mxu0 0.0
        %2203 = vmatpush1.msra.mxu0 %v2021
        %2204 = vmatprep.subr.mxu0 0.0
        %2205 = vmatpush2.msra.mxu0 0.0
        %2206 = vmatprep.subr.mxu0 0.0
        %2207 = vmatpush2.msra.mxu0 0.0
        %2208 = vmatprep.subr.mxu0 0.0
        %2209 = vmatpush2.msra.mxu0 0.0
        %2210 = vmatprep.subr.mxu0 0.0
        %2211 = vmatpush2.msra.mxu0 0.0
        %2212 = vmatprep.subr.mxu0 0.0
        %2213 = vmatpush2.msra.mxu0 0.0
        %2214 = vmatprep.subr.mxu0 0.0
        %2215 = vmatpush2.msra.mxu0 0.0
        %2216 = vmatprep.subr.mxu0 0.0
        %2217 = vmatpush2.msra.mxu0 0.0
        %2218 = vmatprep.subr.mxu0 0.0
        %2219 = vmatpush2.msra.mxu0 0.0
        %2220 = vmatprep.subr.mxu0 0.0
        %2221 = vmatpush2.msra.mxu0 0.0
        %2222 = vmatprep.subr.mxu0 0.0
        %2223 = vmatpush2.msra.mxu0 0.0
        %2224 = vmatprep.subr.mxu0 0.0
        %2225 = vmatpush2.msra.mxu0 0.0
        %2226 = vmatprep.subr.mxu0 0.0
        %2227 = vmatpush2.msra.mxu0 0.0
        %2228 = vmatprep.subr.mxu0 0.0
        %2229 = vmatpush2.msra.mxu0 0.0
        %2230 = vmatprep.subr.mxu0 0.0
        %2231 = vmatpush2.msra.mxu0 0.0
        %2232 = vmatprep.subr.mxu0 0.0
        %2233 = vmatpush2.msra.mxu0 0.0
        %2234 = vmatprep.subr.mxu0 0.0
        %2235 = vmatpush2.msra.mxu0 0.0
        %2236 = vmatprep.mubr.f32.mxu0 0.0
        %2237 = vmatmul.mubr.f32.gmra.mxu0 %v2170
        %v2238 = vpop.f32.mrf.mxu0
        %v2239 = vadd.f32 0.0, %v2238
        %v2240 = vpop.f32.mrf.mxu0
        %2241 = vdwg.mxu0
        %v2243 = vsel %vm1374, %v2016, 0
        %2245 = vmatprep.subr.mxu0 0.0
        %2246 = vmatpush1.msra.mxu0 0.0
        %2247 = vmatprep.subr.mxu0 0.0
        %2248 = vmatpush1.msra.mxu0 0.0
        %2249 = vmatprep.subr.mxu0 0.0
        %2250 = vmatpush1.msra.mxu0 0.0
        %2251 = vmatprep.subr.mxu0 0.0
        %2252 = vmatpush1.msra.mxu0 0.0
        %2253 = vmatprep.subr.mxu0 0.0
        %2254 = vmatpush1.msra.mxu0 0.0
        %2255 = vmatprep.subr.mxu0 0.0
        %2256 = vmatpush1.msra.mxu0 0.0
        %2257 = vmatprep.subr.mxu0 0.0
        %2258 = vmatpush1.msra.mxu0 0.0
        %2259 = vmatprep.subr.mxu0 0.0
        %2260 = vmatpush1.msra.mxu0 0.0
        %2261 = vmatprep.subr.mxu0 0.0
        %2262 = vmatpush1.msra.mxu0 0.0
        %2263 = vmatprep.subr.mxu0 0.0
        %2264 = vmatpush1.msra.mxu0 0.0
        %2265 = vmatprep.subr.mxu0 0.0
        %2266 = vmatpush1.msra.mxu0 0.0
        %2267 = vmatprep.subr.mxu0 0.0
        %2268 = vmatpush1.msra.mxu0 0.0
        %2269 = vmatprep.subr.mxu0 0.0
        %2270 = vmatpush1.msra.mxu0 0.0
        %2271 = vmatprep.subr.mxu0 0.0
        %2272 = vmatpush1.msra.mxu0 0.0
        %2273 = vmatprep.subr.mxu0 0.0
        %2274 = vmatpush1.msra.mxu0 0.0
        %2275 = vmatprep.subr.mxu0 0.0
        %2276 = vmatpush1.msra.mxu0 %v2022
        %2277 = vmatprep.subr.mxu0 0.0
        %2278 = vmatpush2.msra.mxu0 0.0
        %2279 = vmatprep.subr.mxu0 0.0
        %2280 = vmatpush2.msra.mxu0 0.0
        %2281 = vmatprep.subr.mxu0 0.0
        %2282 = vmatpush2.msra.mxu0 0.0
        %2283 = vmatprep.subr.mxu0 0.0
        %2284 = vmatpush2.msra.mxu0 0.0
        %2285 = vmatprep.subr.mxu0 0.0
        %2286 = vmatpush2.msra.mxu0 0.0
        %2287 = vmatprep.subr.mxu0 0.0
        %2288 = vmatpush2.msra.mxu0 0.0
        %2289 = vmatprep.subr.mxu0 0.0
        %2290 = vmatpush2.msra.mxu0 0.0
        %2291 = vmatprep.subr.mxu0 0.0
        %2292 = vmatpush2.msra.mxu0 0.0
        %2293 = vmatprep.subr.mxu0 0.0
        %2294 = vmatpush2.msra.mxu0 0.0
        %2295 = vmatprep.subr.mxu0 0.0
        %2296 = vmatpush2.msra.mxu0 0.0
        %2297 = vmatprep.subr.mxu0 0.0
        %2298 = vmatpush2.msra.mxu0 0.0
        %2299 = vmatprep.subr.mxu0 0.0
        %2300 = vmatpush2.msra.mxu0 0.0
        %2301 = vmatprep.subr.mxu0 0.0
        %2302 = vmatpush2.msra.mxu0 0.0
        %2303 = vmatprep.subr.mxu0 0.0
        %2304 = vmatpush2.msra.mxu0 0.0
        %2305 = vmatprep.subr.mxu0 0.0
        %2306 = vmatpush2.msra.mxu0 0.0
        %2307 = vmatprep.subr.mxu0 0.0
        %2308 = vmatpush2.msra.mxu0 0.0
        %2309 = vmatprep.mubr.f32.mxu0 0.0
        %2310 = vmatmul.mubr.f32.gmra.mxu0 %v2243
        %v2311 = vpop.f32.mrf.mxu0
        %v2312 = vadd.f32 0.0, %v2311
        %v2313 = vpop.f32.mrf.mxu0
        %2314 = vdwg.mxu0
        %v2315 = vsel %vm450, %v2093, 0.0
        %v2316 = vsel %vm450, %v2166, 0.0
        %v2317 = vadd.f32 %v2315, %v2316
        %v2318 = vsel %vm450, %v2239, 0.0
        %v2319 = vadd.f32 %v2317, %v2318
        %v2320 = vsel %vm450, %v2312, 0.0
        %v2321 = vadd.f32 %v2319, %v2320
        %v2322 = vadd.f32 %v447, %v2321
        %v2323 = vld [vmem:[%s5] sm:$0x1]
        %v2325 = vlaneseq
        %v2326 = vshrl.u32 %v2325, 7
        %v2327 = vsub.s32 0, %v2326
        %v2328 = vrot.slane %v2323, %v2327
        %v2330 = vadd.f32 %v2322, %v2328
        %v2331 = vld [vmem:[%s6] sm:$0x1]
        %v2332 = vld [vmem:[%s7] sm:$0x1]
        %v2333 = vsel %vm450, %v2330, 0.0
        %2334 = vadd.xlane.f32.xlu0 %v2333
        %v2335 = vpop.xlane.xlu0 %2334
        %v2336 = vmul.f32 %v2335, %v454
        %v2337 = vsub.f32 %v2330, %v2336
        %v2338 = vmul.f32 %v2337, %v2337
        %v2339 = vsel %vm450, %v2338, 0.0
        %2340 = vadd.xlane.f32.xlu0 %v2339
        %v2341 = vpop.xlane.xlu0 %2340
        %v2342 = vmul.f32 %v2341, %v454
        %v2343 = vadd.f32 %v2342, 1e-05
        %v2344 = vrsqrt.pop %v2343
        %v2345 = vmul.f32 %v2337, %v2344
        %v2347 = vlaneseq
        %v2348 = vshrl.u32 %v2347, 7
        %v2349 = vsub.s32 0, %v2348
        %v2350 = vrot.slane %v2331, %v2349
        %v2352 = vmul.f32 %v2345, %v2350
        %v2354 = vlaneseq
        %v2355 = vshrl.u32 %v2354, 7
        %v2356 = vsub.s32 0, %v2355
        %v2357 = vrot.slane %v2332, %v2356
        %v2359 = vadd.f32 %v2352, %v2357
        %v2360 = vld [vmem:[%s8] sm:$0xff]
        %v2361 = vld [vmem:[%s8 + $0x8] sm:$0xff]
        %v2362 = vld [vmem:[%s8 + $0x10] sm:$0xff]
        %v2363 = vld [vmem:[%s8 + $0x18] sm:$0xff]
        %v2364 = vld [vmem:[%s9] sm:$0x1]
        %v2366 = vlaneseq
        %v2367 = vshrl.u32 %v2366, 7
        %v2368 = vsub.s32 0, %v2367
        %v2369 = vrot.slane %v2364, %v2368
        %v2372 = vsel %vm450, %v2359, 0
        %2374 = vmatprep.subr.mxu0 0.0
        %2375 = vmatpush1.msra.mxu0 0.0
        %2376 = vmatprep.subr.mxu0 0.0
        %2377 = vmatpush1.msra.mxu0 0.0
        %2378 = vmatprep.subr.mxu0 0.0
        %2379 = vmatpush1.msra.mxu0 0.0
        %2380 = vmatprep.subr.mxu0 0.0
        %2381 = vmatpush1.msra.mxu0 0.0
        %2382 = vmatprep.subr.mxu0 0.0
        %2383 = vmatpush1.msra.mxu0 0.0
        %2384 = vmatprep.subr.mxu0 0.0
        %2385 = vmatpush1.msra.mxu0 0.0
        %2386 = vmatprep.subr.mxu0 0.0
        %2387 = vmatpush1.msra.mxu0 0.0
        %2388 = vmatprep.subr.mxu0 0.0
        %2389 = vmatpush1.msra.mxu0 0.0
        %2390 = vmatprep.subr.mxu0 0.0
        %2391 = vmatpush1.msra.mxu0 0.0
        %2392 = vmatprep.subr.mxu0 0.0
        %2393 = vmatpush1.msra.mxu0 0.0
        %2394 = vmatprep.subr.mxu0 0.0
        %2395 = vmatpush1.msra.mxu0 0.0
        %2396 = vmatprep.subr.mxu0 0.0
        %2397 = vmatpush1.msra.mxu0 0.0
        %2398 = vmatprep.subr.mxu0 0.0
        %2399 = vmatpush1.msra.mxu0 %v2363
        %2400 = vmatprep.subr.mxu0 0.0
        %2401 = vmatpush1.msra.mxu0 %v2362
        %2402 = vmatprep.subr.mxu0 0.0
        %2403 = vmatpush1.msra.mxu0 %v2361
        %2404 = vmatprep.subr.mxu0 0.0
        %2405 = vmatpush1.msra.mxu0 %v2360
        %2406 = vmatprep.subr.mxu0 0.0
        %2407 = vmatpush2.msra.mxu0 0.0
        %2408 = vmatprep.subr.mxu0 0.0
        %2409 = vmatpush2.msra.mxu0 0.0
        %2410 = vmatprep.subr.mxu0 0.0
        %2411 = vmatpush2.msra.mxu0 0.0
        %2412 = vmatprep.subr.mxu0 0.0
        %2413 = vmatpush2.msra.mxu0 0.0
        %2414 = vmatprep.subr.mxu0 0.0
        %2415 = vmatpush2.msra.mxu0 0.0
        %2416 = vmatprep.subr.mxu0 0.0
        %2417 = vmatpush2.msra.mxu0 0.0
        %2418 = vmatprep.subr.mxu0 0.0
        %2419 = vmatpush2.msra.mxu0 0.0
        %2420 = vmatprep.subr.mxu0 0.0
        %2421 = vmatpush2.msra.mxu0 0.0
        %2422 = vmatprep.subr.mxu0 0.0
        %2423 = vmatpush2.msra.mxu0 0.0
        %2424 = vmatprep.subr.mxu0 0.0
        %2425 = vmatpush2.msra.mxu0 0.0
        %2426 = vmatprep.subr.mxu0 0.0
        %2427 = vmatpush2.msra.mxu0 0.0
        %2428 = vmatprep.subr.mxu0 0.0
        %2429 = vmatpush2.msra.mxu0 0.0
        %2430 = vmatprep.subr.mxu0 0.0
        %2431 = vmatpush2.msra.mxu0 0.0
        %2432 = vmatprep.subr.mxu0 0.0
        %2433 = vmatpush2.msra.mxu0 0.0
        %2434 = vmatprep.subr.mxu0 0.0
        %2435 = vmatpush2.msra.mxu0 0.0
        %2436 = vmatprep.subr.mxu0 0.0
        %2437 = vmatpush2.msra.mxu0 0.0
        %2438 = vmatprep.mubr.f32.mxu0 0.0
        %2439 = vmatmul.mubr.f32.gmra.mxu0 %v2372
        %v2440 = vpop.f32.mrf.mxu0
        %v2441 = vadd.f32 %v2369, %v2440
        %v2442 = vpop.f32.mrf.mxu0
        %2443 = vdwg.mxu0
        %v2444 = vmax.f32 %v2441, 0.0
        %v2445 = vld [vmem:[%s10] sm:$0xff]
        %v2446 = vld [vmem:[%s10 + $0x8] sm:$0xff]
        %v2447 = vld [vmem:[%s10 + $0x10] sm:$0xff]
        %v2448 = vld [vmem:[%s10 + $0x18] sm:$0xff]
        %v2449 = vld [vmem:[%s10 + $0x20] sm:$0xff]
        %v2450 = vld [vmem:[%s10 + $0x28] sm:$0xff]
        %v2451 = vld [vmem:[%s10 + $0x30] sm:$0xff]
        %v2452 = vld [vmem:[%s10 + $0x38] sm:$0xff]
        %v2453 = vld [vmem:[%s10 + $0x40] sm:$0xff]
        %v2454 = vld [vmem:[%s10 + $0x48] sm:$0xff]
        %v2455 = vld [vmem:[%s10 + $0x50] sm:$0xff]
        %v2456 = vld [vmem:[%s10 + $0x58] sm:$0xff]
        %v2457 = vld [vmem:[%s10 + $0x60] sm:$0xff]
        %v2458 = vld [vmem:[%s10 + $0x68] sm:$0xff]
        %v2459 = vld [vmem:[%s10 + $0x70] sm:$0xff]
        %v2460 = vld [vmem:[%s10 + $0x78] sm:$0xff]
        %v2461 = vld [vmem:[%s11] sm:$0x1]
        %v2463 = vlaneseq
        %v2464 = vshrl.u32 %v2463, 7
        %v2465 = vsub.s32 0, %v2464
        %v2466 = vrot.slane %v2461, %v2465
        %2468 = vmatprep.subr.mxu0 0.0
        %2469 = vmatpush1.msra.mxu0 %v2460
        %2470 = vmatprep.subr.mxu0 0.0
        %2471 = vmatpush1.msra.mxu0 %v2459
        %2472 = vmatprep.subr.mxu0 0.0
        %2473 = vmatpush1.msra.mxu0 %v2458
        %2474 = vmatprep.subr.mxu0 0.0
        %2475 = vmatpush1.msra.mxu0 %v2457
        %2476 = vmatprep.subr.mxu0 0.0
        %2477 = vmatpush1.msra.mxu0 %v2456
        %2478 = vmatprep.subr.mxu0 0.0
        %2479 = vmatpush1.msra.mxu0 %v2455
        %2480 = vmatprep.subr.mxu0 0.0
        %2481 = vmatpush1.msra.mxu0 %v2454
        %2482 = vmatprep.subr.mxu0 0.0
        %2483 = vmatpush1.msra.mxu0 %v2453
        %2484 = vmatprep.subr.mxu0 0.0
        %2485 = vmatpush1.msra.mxu0 %v2452
        %2486 = vmatprep.subr.mxu0 0.0
        %2487 = vmatpush1.msra.mxu0 %v2451
        %2488 = vmatprep.subr.mxu0 0.0
        %2489 = vmatpush1.msra.mxu0 %v2450
        %2490 = vmatprep.subr.mxu0 0.0
        %2491 = vmatpush1.msra.mxu0 %v2449
        %2492 = vmatprep.subr.mxu0 0.0
        %2493 = vmatpush1.msra.mxu0 %v2448
        %2494 = vmatprep.subr.mxu0 0.0
        %2495 = vmatpush1.msra.mxu0 %v2447
        %2496 = vmatprep.subr.mxu0 0.0
        %2497 = vmatpush1.msra.mxu0 %v2446
        %2498 = vmatprep.subr.mxu0 0.0
        %2499 = vmatpush1.msra.mxu0 %v2445
        %2500 = vmatprep.subr.mxu0 0.0
        %2501 = vmatpush2.msra.mxu0 0.0
        %2502 = vmatprep.subr.mxu0 0.0
        %2503 = vmatpush2.msra.mxu0 0.0
        %2504 = vmatprep.subr.mxu0 0.0
        %2505 = vmatpush2.msra.mxu0 0.0
        %2506 = vmatprep.subr.mxu0 0.0
        %2507 = vmatpush2.msra.mxu0 0.0
        %2508 = vmatprep.subr.mxu0 0.0
        %2509 = vmatpush2.msra.mxu0 0.0
        %2510 = vmatprep.subr.mxu0 0.0
        %2511 = vmatpush2.msra.mxu0 0.0
        %2512 = vmatprep.subr.mxu0 0.0
        %2513 = vmatpush2.msra.mxu0 0.0
        %2514 = vmatprep.subr.mxu0 0.0
        %2515 = vmatpush2.msra.mxu0 0.0
        %2516 = vmatprep.subr.mxu0 0.0
        %2517 = vmatpush2.msra.mxu0 0.0
        %2518 = vmatprep.subr.mxu0 0.0
        %2519 = vmatpush2.msra.mxu0 0.0
        %2520 = vmatprep.subr.mxu0 0.0
        %2521 = vmatpush2.msra.mxu0 0.0
        %2522 = vmatprep.subr.mxu0 0.0
        %2523 = vmatpush2.msra.mxu0 0.0
        %2524 = vmatprep.subr.mxu0 0.0
        %2525 = vmatpush2.msra.mxu0 0.0
        %2526 = vmatprep.subr.mxu0 0.0
        %2527 = vmatpush2.msra.mxu0 0.0
        %2528 = vmatprep.subr.mxu0 0.0
        %2529 = vmatpush2.msra.mxu0 0.0
        %2530 = vmatprep.subr.mxu0 0.0
        %2531 = vmatpush2.msra.mxu0 0.0
        %2532 = vmatprep.mubr.f32.mxu0 0.0
        %2533 = vmatmul.mubr.f32.gmra.mxu0 %v2444
        %v2534 = vpop.f32.mrf.mxu0
        %v2535 = vadd.f32 %v2466, %v2534
        %v2536 = vpop.f32.mrf.mxu0
        %2537 = vdwg.mxu0
        %v2538 = vadd.f32 %v2330, %v2535
        %2539 = vst.msk [vmem:[%s435] sm:$0xff] %vm450, %v2538
        %s2540 = sand.u32 %s296, 1
        %s2541 = scalar_lea.sflag [#allocation3], %s2540
        %s2542 = sand.u32 %s296, 1
        %s2543 = smul.addr %s2542, 8
        %s2544 = scalar_lea.vmem [#allocation2], %s2543
        %s2545 = sand.u32 %s322, 1
        %s2546 = scalar_lea.sflag [#allocation5], %s2545
        %s2547 = sand.u32 %s322, 1
        %s2548 = smul.addr %s2547, 32
        %s2549 = scalar_lea.vmem [#allocation4], %s2548
        // Predicated region
        $region69: #{tpu_custom_call.1} parent=67 // pred_check
          %p2550 = pneg %p306
        $region70: #{tpu_custom_call.1} parent=67 // pred_check_branch
          %2552 = sbr.rel (%p2550) target = $region72
        $region71: #{tpu_custom_call.1} parent=67 // pred_region
          %s2554 = ssub.s32 128, 128
          %2555 = vsyncadd %s2541, %s2554
          %s2556 = smul.addr %s31, 128
          %s2557 = scalar_lea.hbm %s12, %s2556
          %s2559 = sshll.u32 %s2544, 4
          %s2560 = int_to_ptr.vmem [resolvable:$true] %s2559
          %2562 = dma.vmem_to_hbm [thread:$0]  %s2560, 128, %s2557, %s2541
        $region72: #{tpu_custom_call.1} parent=67 // pred_fallthru
          _
        // Predicated region
        $region73: #{tpu_custom_call.1} parent=67 // pred_check
          %p2563 = pneg %p332
        $region74: #{tpu_custom_call.1} parent=67 // pred_check_branch
          %2565 = sbr.rel (%p2563) target = $region76
        $region75: #{tpu_custom_call.1} parent=67 // pred_region
          %s2567 = ssub.s32 512, 512
          %2568 = vsyncadd %s2546, %s2567
          %s2569 = smul.addr %s31, 128
          %s2570 = scalar_lea.hbm %s13, %s2569
          %s2571 = sshll.u32 %s2549, 4
          %s2572 = int_to_ptr.vmem [resolvable:$true] %s2571
          %2577 = dma.vmem_to_hbm [thread:$0]  %s2572, 512, %s2570, %s2546, 128, 256, 8
        $region76: #{tpu_custom_call.1} parent=67 // pred_fallthru
          _
      $region68: #{tpu_custom_call.1} parent=5 // pred_fallthru
        _
      %p2578 = scmp.le.s32.totalorder 2, %s26
      // Predicated region
      $region77: #{tpu_custom_call.1} parent=5 // pred_check
        %p2579 = pneg %p2578
      $region78: #{tpu_custom_call.1} parent=5 // pred_check_branch
        %2581 = sbr.rel (%p2579) target = $region80
      $region79: #{tpu_custom_call.1} parent=5 // pred_region
        %s2582 = ssub.s32 %s26, 2
        // Predicated region
        $region81: #{tpu_custom_call.1} parent=79 // pred_check
          %p2583 = pneg %p312
        $region82: #{tpu_custom_call.1} parent=79 // pred_check_branch
          %2585 = sbr.rel (%p2583) target = $region84
        $region83: #{tpu_custom_call.1} parent=79 // pred_region
          %s2586 = sand.u32 %s297, 1
          %s2587 = scalar_lea.sflag [#allocation3], %s2586
          %s2588 = sand.u32 %s297, 1
          %s2589 = smul.addr %s2588, 8
          %s2590 = scalar_lea.vmem [#allocation2], %s2589
          %2591 = dma.done %s2587, 128
        $region84: #{tpu_custom_call.1} parent=79 // pred_fallthru
          _
        // Predicated region
        $region85: #{tpu_custom_call.1} parent=79 // pred_check
          %p2592 = pneg %p338
        $region86: #{tpu_custom_call.1} parent=79 // pred_check_branch
          %2594 = sbr.rel (%p2592) target = $region88
        $region87: #{tpu_custom_call.1} parent=79 // pred_region
          %s2595 = sand.u32 %s323, 1
          %s2596 = scalar_lea.sflag [#allocation5], %s2595
          %s2597 = sand.u32 %s323, 1
          %s2598 = smul.addr %s2597, 32
          %s2599 = scalar_lea.vmem [#allocation4], %s2598
          %2600 = dma.done %s2596, 512
        $region88: #{tpu_custom_call.1} parent=79 // pred_fallthru
          _
      $region80: #{tpu_custom_call.1} parent=5 // pred_fallthru
        _
    $region6: #{tpu_custom_call.1} parent=1 // loop_footer
      %s30 = sadd.s32 1, %s26
    $region7: #{tpu_custom_call.1} parent=1 // loop_footer_branch
      %25 = sbr.rel target = $region3
    $region8: #{tpu_custom_call.1} parent=1 // loop_exit
      _
    %2601 = vsyncpa [#allocation3], 1
    %s2602 = scalar_lea.sflag [#allocation3], 1
    %2603 = vsyncpa %s2602, 1
    %2604 = vsyncpa [#allocation5], 1
    %s2605 = scalar_lea.sflag [#allocation5], 1
    %2606 = vsyncpa %s2605, 1

</llo_original>
